<compile_context>
chip_gen: v5e
topology: v5e:2x2
jax: 0.10.0
libtpu: 0.0.40
codegen_flags: <defaults>
</compile_context>

<pallas_src>
import functools

import jax
import jax.numpy as jnp
from jax.experimental import pallas as pl
from jax.experimental.pallas import tpu as pltpu


# ----------------------------------------------------------------------------
# Config (scaled-down OPT decoder, do_layer_norm_before=True, tied lm_head)
# ----------------------------------------------------------------------------
class MiniOPTConfig:
    vocab_size = 512
    hidden = 128
    num_heads = 4
    head_dim = 32
    ffn_dim = 256
    num_layers = 2
    max_positions = 64
    pos_offset = 2       # OPTLearnedPositionalEmbedding offset
    ln_eps = 1e-5


# ----------------------------------------------------------------------------
# Fused transformer kernel: grid = (batch, layer)
# ----------------------------------------------------------------------------
def _fused_opt_kernel(h0_ref, cmask_ref, hmask_ref,
                      ln1_g_ref, ln1_b_ref, wqkv_ref, bqkv_ref, wo_ref, bo_ref,
                      ln2_g_ref, ln2_b_ref, w1_ref, b1_ref, w2_ref, b2_ref,
                      fln_g_ref, fln_b_ref, embT_ref,
                      logits_ref,
                      h_vmem,
                      *, S, NH, HD, eps):
    layer = pl.program_id(1)
    H = NH * HD

    @pl.when(layer == 0)
    def _():
        h_vmem[...] = h0_ref[...]          # (S, H) fp32, per-batch hidden state

    def layer_norm(x, g, b):
        mean = jnp.mean(x, axis=-1, keepdims=True)
        var = jnp.mean((x - mean) ** 2, axis=-1, keepdims=True)
        return (x - mean) * jax.lax.rsqrt(var + eps) * g + b

    h = h_vmem[...]                                         # (S, H) fp32

    # ---------------- self-attention block (pre-LN) ----------------
    hn = layer_norm(h, ln1_g_ref[...], ln1_b_ref[...]).astype(jnp.bfloat16)
    qkv = jnp.dot(hn, wqkv_ref[...],
                  preferred_element_type=jnp.float32) + bqkv_ref[...]   # (S, 3H) f32
    q = qkv[:, 0 * H:1 * H]                      # scale pre-folded into wq/bq
    k = qkv[:, 1 * H:2 * H].astype(jnp.bfloat16)
    v = qkv[:, 2 * H:3 * H].astype(jnp.bfloat16)

    # Head-stacked attention: row block h of qstack holds q masked to head-h
    # columns, so a single full-width contraction against k yields per-head
    # scores without any 32-lane slicing.
    hmask = hmask_ref[...]                                  # (NH, 1, H) fp32 0/1
    qstack = (jnp.broadcast_to(q, (NH, S, H)) * hmask).reshape(NH * S, H)
    qstack = qstack.astype(jnp.bfloat16)

    s = jax.lax.dot_general(qstack, k, (((1,), (1,)), ((), ())),
                            preferred_element_type=jnp.float32)        # (NH*S, S)
    s = s + cmask_ref[...]                                  # additive causal mask
    m = jnp.max(s, axis=-1, keepdims=True)
    p = jnp.exp(s - m)
    p = p * pl.reciprocal(jnp.sum(p, axis=-1, keepdims=True), approx=True)

    pv = jnp.dot(p.astype(jnp.bfloat16), v,
                 preferred_element_type=jnp.float32)        # (NH*S, H)
    # keep only each head's own value columns and collapse the head axis
    attn = jnp.sum(pv.reshape(NH, S, H) * hmask, axis=0)    # (S, H) fp32

    attn = jnp.dot(attn.astype(jnp.bfloat16), wo_ref[...],
                   preferred_element_type=jnp.float32) + bo_ref[...]
    h = h + attn

    # ---------------- feed-forward block (pre-LN, ReLU) ----------------
    hn = layer_norm(h, ln2_g_ref[...], ln2_b_ref[...]).astype(jnp.bfloat16)
    f = jnp.dot(hn, w1_ref[...], preferred_element_type=jnp.float32) + b1_ref[...]
    f = jnp.maximum(f, 0.0)
    f = jnp.dot(f.astype(jnp.bfloat16), w2_ref[...],
                preferred_element_type=jnp.float32) + b2_ref[...]
    h = h + f

    h_vmem[...] = h

    # ---------------- final LN + tied lm_head (no bias) at last layer ----------
    @pl.when(layer == pl.num_programs(1) - 1)
    def _():
        hf = layer_norm(h, fln_g_ref[...], fln_b_ref[...]).astype(jnp.bfloat16)
        logits_ref[...] = jnp.dot(hf, embT_ref[...],
                                  preferred_element_type=jnp.float32)   # (S, V)


def fused_opt_forward(h0, kp, cfg, B, S):
    """h0: (B, S, H) fp32 embedded tokens. Returns logits (B, S, V) fp32."""
    H, F, V = cfg.hidden, cfg.ffn_dim, cfg.vocab_size
    NH, L = cfg.num_heads, cfg.num_layers

    # Host-built constants, resident in VMEM for the whole grid.
    row = jnp.arange(S, dtype=jnp.int32)[:, None]
    col = jnp.arange(S, dtype=jnp.int32)[None, :]
    cmask = jnp.where(col <= row, 0.0, -1e30).astype(jnp.float32)        # (S, S)
    cmask = jnp.tile(cmask, (NH, 1))                                     # (NH*S, S)
    hmask = (jnp.arange(H, dtype=jnp.int32)[None, :] // cfg.head_dim ==
             jnp.arange(NH, dtype=jnp.int32)[:, None]
             ).astype(jnp.float32)[:, None, :]                           # (NH, 1, H)

    def per_layer(last2):
        # (L, ...) stacked per-layer param; leading layer dim squeezed away.
        return pl.BlockSpec((None,) + last2, lambda b, l: (l, 0, 0))

    def shared2(shape2):
        return pl.BlockSpec(shape2, lambda b, l: (0, 0))

    def shared3(shape3):
        return pl.BlockSpec(shape3, lambda b, l: (0, 0, 0))

    grid_spec = pltpu.PrefetchScalarGridSpec(
        num_scalar_prefetch=0,
        grid=(B, L),                                         # batch parallel, layer sequential
        in_specs=[
            pl.BlockSpec((None, S, H), lambda b, l: (b, 0, 0)),   # h0 (per-batch)
            shared2((NH * S, S)),                            # additive causal mask
            shared3((NH, 1, H)),                             # per-head column mask
            per_layer((1, H)), per_layer((1, H)),            # attn LN g, b
            per_layer((H, 3 * H)), per_layer((1, 3 * H)),    # wqkv (q pre-scaled), bqkv
            per_layer((H, H)), per_layer((1, H)),            # wo, bo
            per_layer((1, H)), per_layer((1, H)),            # ffn LN g, b
            per_layer((H, F)), per_layer((1, F)),            # w1, b1
            per_layer((F, H)), per_layer((1, H)),            # w2, b2
            shared2((1, H)), shared2((1, H)),                # final LN g, b
            shared2((H, V)),                                 # tied lm_head weight (H, V) bf16
        ],
        out_specs=pl.BlockSpec((None, S, V), lambda b, l: (b, 0, 0)),
        scratch_shapes=[pltpu.VMEM((S, H), jnp.float32)],    # resident hidden state
    )

    return pl.pallas_call(
        functools.partial(_fused_opt_kernel, S=S, NH=NH, HD=cfg.head_dim,
                          eps=cfg.ln_eps),
        grid_spec=grid_spec,
        out_shape=jax.ShapeDtypeStruct((B, S, V), jnp.float32),
        compiler_params=pltpu.CompilerParams(
            dimension_semantics=("parallel", "arbitrary")),
    )(h0, cmask, hmask,
      kp["ln1_g"], kp["ln1_b"], kp["wqkv"], kp["bqkv"], kp["wo"], kp["bo"],
      kp["ln2_g"], kp["ln2_b"], kp["w1"], kp["b1"], kp["w2"], kp["b2"],
      kp["fln_g"], kp["fln_b"], kp["embT"])


# ----------------------------------------------------------------------------
# Parameter construction (mirrors the PyTorch module structure), then packed
# once into kernel-friendly stacked / scaled / transposed / bf16 form.
# ----------------------------------------------------------------------------
def init_params(cfg, key):
    std = 0.02

    def nrm(k, shape):
        return (jax.random.normal(k, shape, jnp.float32) * std).astype(jnp.float32)

    keys = jax.random.split(key, 3 + cfg.num_layers)
    params = {
        "embed_tokens": nrm(keys[0], (cfg.vocab_size, cfg.hidden)),
        "embed_positions": nrm(keys[1], (cfg.max_positions + cfg.pos_offset, cfg.hidden)),
        "final_ln_g": jnp.ones((cfg.hidden,), jnp.float32),
        "final_ln_b": jnp.zeros((cfg.hidden,), jnp.float32),
        "layers": [],
    }
    for li in range(cfg.num_layers):
        lkeys = jax.random.split(keys[3 + li], 6)
        H, F = cfg.hidden, cfg.ffn_dim
        layer = {
            "attn_ln_g": jnp.ones((H,), jnp.float32),
            "attn_ln_b": jnp.zeros((H,), jnp.float32),
            "wq": nrm(lkeys[0], (H, H)), "bq": jnp.zeros((H,), jnp.float32),
            "wk": nrm(lkeys[1], (H, H)), "bk": jnp.zeros((H,), jnp.float32),
            "wv": nrm(lkeys[2], (H, H)), "bv": jnp.zeros((H,), jnp.float32),
            "wo": nrm(lkeys[3], (H, H)), "bo": jnp.zeros((H,), jnp.float32),
            "ffn_ln_g": jnp.ones((H,), jnp.float32),
            "ffn_ln_b": jnp.zeros((H,), jnp.float32),
            "w1": nrm(lkeys[4], (H, F)), "b1": jnp.zeros((F,), jnp.float32),
            "w2": nrm(lkeys[5], (F, H)), "b2": jnp.zeros((H,), jnp.float32),
        }
        params["layers"].append(layer)
    return params


def prepare_kernel_weights(params, cfg):
    H, F, L = cfg.hidden, cfg.ffn_dim, cfg.num_layers
    scale = float(cfg.head_dim) ** -0.5
    layers = params["layers"]

    def stack(name):
        return jnp.stack([layers[li][name] for li in range(L)])

    # Fused QKV with the attention scale folded into the Q columns (host-side).
    wqkv = jnp.stack([
        jnp.concatenate([layers[li]["wq"] * scale, layers[li]["wk"], layers[li]["wv"]],
                        axis=1)
        for li in range(L)
    ]).astype(jnp.bfloat16)                                        # (L, H, 3H)
    bqkv = jnp.stack([
        jnp.concatenate([layers[li]["bq"] * scale, layers[li]["bk"], layers[li]["bv"]])
        for li in range(L)
    ]).reshape(L, 1, 3 * H)                                        # (L, 1, 3H) fp32

    return {
        "ln1_g": stack("attn_ln_g").reshape(L, 1, H),
        "ln1_b": stack("attn_ln_b").reshape(L, 1, H),
        "wqkv": wqkv,
        "bqkv": bqkv,
        "wo": stack("wo").astype(jnp.bfloat16),
        "bo": stack("bo").reshape(L, 1, H),
        "ln2_g": stack("ffn_ln_g").reshape(L, 1, H),
        "ln2_b": stack("ffn_ln_b").reshape(L, 1, H),
        "w1": stack("w1").astype(jnp.bfloat16),
        "b1": stack("b1").reshape(L, 1, F),
        "w2": stack("w2").astype(jnp.bfloat16),
        "b2": stack("b2").reshape(L, 1, H),
        "fln_g": params["final_ln_g"].reshape(1, H),
        "fln_b": params["final_ln_b"].reshape(1, H),
        "emb_f32": params["embed_tokens"],                         # (V, H) fp32, gather
        "embT": params["embed_tokens"].T.astype(jnp.bfloat16),     # (H, V) bf16, lm_head
        "pos_emb": params["embed_positions"],
    }


def opt_forward(kp, input_ids, cfg):
    B, S = input_ids.shape
    H = cfg.hidden

    # TODO(synk): token-embedding gather + learned positional lookup stay in XLA
    # glue (no clean rectangular BlockSpec form for a vocab gather at these dims).
    h = jnp.take(kp["emb_f32"], input_ids.reshape(-1), axis=0).reshape(B, S, H)
    pos = jnp.arange(S, dtype=jnp.int32) + cfg.pos_offset
    h = h + jnp.take(kp["pos_emb"], pos, axis=0)[None, :, :]      # (B, S, H) fp32

    return fused_opt_forward(h, kp, cfg, B, S)                    # (B, S, V)


# ----------------------------------------------------------------------------
if __name__ == "__main__":
    cfg = MiniOPTConfig()
    key = jax.random.PRNGKey(0)
    pkey, xkey = jax.random.split(key)

    params = init_params(cfg, pkey)
    kernel_weights = prepare_kernel_weights(params, cfg)

    B, S = 2, 16
    input_ids = jax.random.randint(xkey, (B, S), 0, cfg.vocab_size, dtype=jnp.int32)

    fwd = jax.jit(functools.partial(opt_forward, cfg=cfg))
    logits = fwd(kernel_weights, input_ids)
    jax.block_until_ready(logits)

    assert logits.shape == (B, S, cfg.vocab_size)
    assert logits.dtype == jnp.float32
    assert bool(jnp.all(jnp.isfinite(logits)))
    print("KERNEL_OK")
</pallas_src>

<mosaic_0001>
module attributes {stable_mosaic.version = 11 : i64} {
  func.func @_fused_opt_kernel(%arg0: i32, %arg1: i32, %arg2: memref<1x16x128xf32, #tpu.memory_space<vmem>>, %arg3: memref<64x16xf32, #tpu.memory_space<vmem>>, %arg4: memref<4x1x128xf32, #tpu.memory_space<vmem>>, %arg5: memref<1x1x128xf32, #tpu.memory_space<vmem>>, %arg6: memref<1x1x128xf32, #tpu.memory_space<vmem>>, %arg7: memref<1x128x384xbf16, #tpu.memory_space<vmem>>, %arg8: memref<1x1x384xf32, #tpu.memory_space<vmem>>, %arg9: memref<1x128x128xbf16, #tpu.memory_space<vmem>>, %arg10: memref<1x1x128xf32, #tpu.memory_space<vmem>>, %arg11: memref<1x1x128xf32, #tpu.memory_space<vmem>>, %arg12: memref<1x1x128xf32, #tpu.memory_space<vmem>>, %arg13: memref<1x128x256xbf16, #tpu.memory_space<vmem>>, %arg14: memref<1x1x256xf32, #tpu.memory_space<vmem>>, %arg15: memref<1x256x128xbf16, #tpu.memory_space<vmem>>, %arg16: memref<1x1x128xf32, #tpu.memory_space<vmem>>, %arg17: memref<1x128xf32, #tpu.memory_space<vmem>>, %arg18: memref<1x128xf32, #tpu.memory_space<vmem>>, %arg19: memref<128x512xbf16, #tpu.memory_space<vmem>>, %arg20: memref<1x16x512xf32, #tpu.memory_space<vmem>>, %arg21: memref<16x128xf32, #tpu.memory_space<vmem>>) attributes {dimension_semantics = [#tpu.dimension_semantics<parallel>, #tpu.dimension_semantics<arbitrary>], iteration_bounds = array<i64: 2, 2>, scalar_prefetch = 0 : i64, scratch_operands = 1 : i64, tpu.core_type = #tpu.core_type<tc>, window_params = [{transform_indices = @transform_0, window_bounds = array<i64: 1, 16, 128>}, {pipeline_mode = #tpu.pipeline_mode<synchronous>, transform_indices = @transform_1, window_bounds = array<i64: 64, 16>}, {pipeline_mode = #tpu.pipeline_mode<synchronous>, transform_indices = @transform_2, window_bounds = array<i64: 4, 1, 128>}, {transform_indices = @transform_3, window_bounds = array<i64: 1, 1, 128>}, {transform_indices = @transform_4, window_bounds = array<i64: 1, 1, 128>}, {transform_indices = @transform_5, window_bounds = array<i64: 1, 128, 384>}, {transform_indices = @transform_6, window_bounds = array<i64: 1, 1, 384>}, {transform_indices = @transform_7, window_bounds = array<i64: 1, 128, 128>}, {transform_indices = @transform_8, window_bounds = array<i64: 1, 1, 128>}, {transform_indices = @transform_9, window_bounds = array<i64: 1, 1, 128>}, {transform_indices = @transform_10, window_bounds = array<i64: 1, 1, 128>}, {transform_indices = @transform_11, window_bounds = array<i64: 1, 128, 256>}, {transform_indices = @transform_12, window_bounds = array<i64: 1, 1, 256>}, {transform_indices = @transform_13, window_bounds = array<i64: 1, 256, 128>}, {transform_indices = @transform_14, window_bounds = array<i64: 1, 1, 128>}, {pipeline_mode = #tpu.pipeline_mode<synchronous>, transform_indices = @transform_15, window_bounds = array<i64: 1, 128>}, {pipeline_mode = #tpu.pipeline_mode<synchronous>, transform_indices = @transform_16, window_bounds = array<i64: 1, 128>}, {pipeline_mode = #tpu.pipeline_mode<synchronous>, transform_indices = @transform_17, window_bounds = array<i64: 128, 512>}, {transform_indices = @transform_18, window_bounds = array<i64: 1, 16, 512>}]} {
    %c0_i32 = arith.constant 0 : i32
    %0 = arith.cmpi eq, %arg1, %c0_i32 : i32
    %1 = arith.extui %0 : i1 to i32
    %c0_i32_0 = arith.constant 0 : i32
    %2 = arith.cmpi ne, %1, %c0_i32_0 : i32
    scf.if %2 {
      %c0_65 = arith.constant 0 : index
      %c0_66 = arith.constant 0 : index
      %c0_67 = arith.constant 0 : index
      %127 = vector.load %arg2[%c0_65, %c0_66, %c0_67] : memref<1x16x128xf32, #tpu.memory_space<vmem>>, vector<1x16x128xf32>
      %128 = vector.shape_cast %127 : vector<1x16x128xf32> to vector<16x128xf32>
      %c0_68 = arith.constant 0 : index
      %c0_69 = arith.constant 0 : index
      %129 = vector.load %arg21[%c0_68, %c0_69] : memref<16x128xf32, #tpu.memory_space<vmem>>, vector<16x128xf32>
      tpu.vector_store %arg21[%c0_68, %c0_69], %128 {strides = array<i32>} : memref<16x128xf32, #tpu.memory_space<vmem>>, vector<16x128xf32>,
    } else {
    }
    %c0 = arith.constant 0 : index
    %c0_1 = arith.constant 0 : index
    %3 = vector.load %arg21[%c0, %c0_1] : memref<16x128xf32, #tpu.memory_space<vmem>>, vector<16x128xf32>
    %c0_2 = arith.constant 0 : index
    %c0_3 = arith.constant 0 : index
    %c0_4 = arith.constant 0 : index
    %4 = vector.load %arg5[%c0_2, %c0_3, %c0_4] : memref<1x1x128xf32, #tpu.memory_space<vmem>>, vector<1x1x128xf32>
    %5 = vector.shape_cast %4 : vector<1x1x128xf32> to vector<1x128xf32>
    %c0_5 = arith.constant 0 : index
    %c0_6 = arith.constant 0 : index
    %c0_7 = arith.constant 0 : index
    %6 = vector.load %arg6[%c0_5, %c0_6, %c0_7] : memref<1x1x128xf32, #tpu.memory_space<vmem>>, vector<1x1x128xf32>
    %7 = vector.shape_cast %6 : vector<1x1x128xf32> to vector<1x128xf32>
    %cst = arith.constant dense<0.000000e+00> : vector<16xf32>
    %8 = vector.multi_reduction <add>, %3, %cst [1] : vector<16x128xf32> to vector<16xf32>
    %9 = vector.shape_cast %8 : vector<16xf32> to vector<16x1xf32>
    %cst_8 = arith.constant 1.280000e+02 : f32
    %10 = vector.broadcast %cst_8 : f32 to vector<16x1xf32>
    %11 = arith.divf %9, %10 : vector<16x1xf32>
    %12 = vector.broadcast %11 : vector<16x1xf32> to vector<16x128xf32>
    %13 = arith.subf %3, %12 : vector<16x128xf32>
    %14 = arith.mulf %13, %13 : vector<16x128xf32>
    %cst_9 = arith.constant dense<0.000000e+00> : vector<16xf32>
    %15 = vector.multi_reduction <add>, %14, %cst_9 [1] : vector<16x128xf32> to vector<16xf32>
    %16 = vector.shape_cast %15 : vector<16xf32> to vector<16x1xf32>
    %cst_10 = arith.constant 1.280000e+02 : f32
    %17 = vector.broadcast %cst_10 : f32 to vector<16x1xf32>
    %18 = arith.divf %16, %17 : vector<16x1xf32>
    %19 = vector.broadcast %11 : vector<16x1xf32> to vector<16x128xf32>
    %20 = arith.subf %3, %19 : vector<16x128xf32>
    %cst_11 = arith.constant 9.99999974E-6 : f32
    %21 = vector.broadcast %cst_11 : f32 to vector<16x1xf32>
    %22 = arith.addf %18, %21 : vector<16x1xf32>
    %23 = math.rsqrt %22 : vector<16x1xf32>
    %24 = vector.broadcast %23 : vector<16x1xf32> to vector<16x128xf32>
    %25 = arith.mulf %20, %24 : vector<16x128xf32>
    %26 = vector.broadcast %5 : vector<1x128xf32> to vector<16x128xf32>
    %27 = arith.mulf %25, %26 : vector<16x128xf32>
    %28 = vector.broadcast %7 : vector<1x128xf32> to vector<16x128xf32>
    %29 = arith.addf %27, %28 : vector<16x128xf32>
    %30 = arith.truncf %29 : vector<16x128xf32> to vector<16x128xbf16>
    %c0_12 = arith.constant 0 : index
    %c0_13 = arith.constant 0 : index
    %c0_14 = arith.constant 0 : index
    %31 = vector.load %arg7[%c0_12, %c0_13, %c0_14] : memref<1x128x384xbf16, #tpu.memory_space<vmem>>, vector<1x128x384xbf16>
    %32 = vector.shape_cast %31 : vector<1x128x384xbf16> to vector<128x384xbf16>
    %cst_15 = arith.constant dense<0.000000e+00> : vector<16x384xf32>
    %33 = tpu.matmul %30, %32, %cst_15 {dimension_numbers = #tpu.dot_dimension_numbers<[1], [0], [0], [1], [0, 0, 1, 1], [], []>} : vector<16x128xbf16>, vector<128x384xbf16>, vector<16x384xf32> -> vector<16x384xf32>
    %c0_16 = arith.constant 0 : index
    %c0_17 = arith.constant 0 : index
    %c0_18 = arith.constant 0 : index
    %34 = vector.load %arg8[%c0_16, %c0_17, %c0_18] : memref<1x1x384xf32, #tpu.memory_space<vmem>>, vector<1x1x384xf32>
    %35 = vector.shape_cast %34 : vector<1x1x384xf32> to vector<1x384xf32>
    %36 = vector.broadcast %35 : vector<1x384xf32> to vector<16x384xf32>
    %37 = arith.addf %33, %36 : vector<16x384xf32>
    %38 = vector.extract_strided_slice %37 {offsets = [0, 0], sizes = [16, 128], strides = [1, 1]} : vector<16x384xf32> to vector<16x128xf32>
    %39 = vector.extract_strided_slice %37 {offsets = [0, 128], sizes = [16, 128], strides = [1, 1]} : vector<16x384xf32> to vector<16x128xf32>
    %40 = arith.truncf %39 : vector<16x128xf32> to vector<16x128xbf16>
    %41 = vector.extract_strided_slice %37 {offsets = [0, 256], sizes = [16, 128], strides = [1, 1]} : vector<16x384xf32> to vector<16x128xf32>
    %42 = arith.truncf %41 : vector<16x128xf32> to vector<16x128xbf16>
    %c0_19 = arith.constant 0 : index
    %c0_20 = arith.constant 0 : index
    %c0_21 = arith.constant 0 : index
    %43 = vector.load %arg4[%c0_19, %c0_20, %c0_21] : memref<4x1x128xf32, #tpu.memory_space<vmem>>, vector<4x1x128xf32>
    %44 = vector.shape_cast %38 : vector<16x128xf32> to vector<1x16x128xf32>
    %45 = vector.broadcast %44 : vector<1x16x128xf32> to vector<4x16x128xf32>
    %46 = vector.broadcast %43 : vector<4x1x128xf32> to vector<4x16x128xf32>
    %47 = arith.mulf %45, %46 : vector<4x16x128xf32>
    %48 = vector.shape_cast %47 : vector<4x16x128xf32> to vector<64x128xf32>
    %49 = arith.truncf %48 : vector<64x128xf32> to vector<64x128xbf16>
    %cst_22 = arith.constant dense<0.000000e+00> : vector<64x16xf32>
    %50 = tpu.matmul %49, %40, %cst_22 {dimension_numbers = #tpu.dot_dimension_numbers<[1], [1], [0], [0], [0, 0, 1, 0], [], []>} : vector<64x128xbf16>, vector<16x128xbf16>, vector<64x16xf32> -> vector<64x16xf32>
    %c0_23 = arith.constant 0 : index
    %c0_24 = arith.constant 0 : index
    %51 = vector.load %arg3[%c0_23, %c0_24] : memref<64x16xf32, #tpu.memory_space<vmem>>, vector<64x16xf32>
    %52 = arith.addf %50, %51 : vector<64x16xf32>
    %cst_25 = arith.constant dense<0xFF800000> : vector<64xf32>
    %53 = vector.multi_reduction <maximumf>, %52, %cst_25 [1] : vector<64x16xf32> to vector<64xf32>
    %54 = vector.shape_cast %53 : vector<64xf32> to vector<64x1xf32>
    %55 = vector.broadcast %54 : vector<64x1xf32> to vector<64x16xf32>
    %56 = arith.subf %52, %55 : vector<64x16xf32>
    %57 = math.exp %56 : vector<64x16xf32>
    %cst_26 = arith.constant dense<0.000000e+00> : vector<64xf32>
    %58 = vector.multi_reduction <add>, %57, %cst_26 [1] : vector<64x16xf32> to vector<64xf32>
    %59 = vector.shape_cast %58 : vector<64xf32> to vector<64x1xf32>
    %60 = tpu.reciprocal %59 {approx = true} : vector<64x1xf32> -> vector<64x1xf32>
    %61 = vector.broadcast %60 : vector<64x1xf32> to vector<64x16xf32>
    %62 = arith.mulf %57, %61 : vector<64x16xf32>
    %63 = arith.truncf %62 : vector<64x16xf32> to vector<64x16xbf16>
    %cst_27 = arith.constant dense<0.000000e+00> : vector<64x128xf32>
    %64 = tpu.matmul %63, %42, %cst_27 {dimension_numbers = #tpu.dot_dimension_numbers<[1], [0], [0], [1], [0, 0, 1, 1], [], []>} : vector<64x16xbf16>, vector<16x128xbf16>, vector<64x128xf32> -> vector<64x128xf32>
    %65 = vector.shape_cast %64 : vector<64x128xf32> to vector<4x16x128xf32>
    %66 = vector.broadcast %43 : vector<4x1x128xf32> to vector<4x16x128xf32>
    %67 = arith.mulf %65, %66 : vector<4x16x128xf32>
    %cst_28 = arith.constant dense<0.000000e+00> : vector<16x128xf32>
    %68 = vector.multi_reduction <add>, %67, %cst_28 [0] : vector<4x16x128xf32> to vector<16x128xf32>
    %69 = arith.truncf %68 : vector<16x128xf32> to vector<16x128xbf16>
    %c0_29 = arith.constant 0 : index
    %c0_30 = arith.constant 0 : index
    %c0_31 = arith.constant 0 : index
    %70 = vector.load %arg9[%c0_29, %c0_30, %c0_31] : memref<1x128x128xbf16, #tpu.memory_space<vmem>>, vector<1x128x128xbf16>
    %71 = vector.shape_cast %70 : vector<1x128x128xbf16> to vector<128x128xbf16>
    %cst_32 = arith.constant dense<0.000000e+00> : vector<16x128xf32>
    %72 = tpu.matmul %69, %71, %cst_32 {dimension_numbers = #tpu.dot_dimension_numbers<[1], [0], [0], [1], [0, 0, 1, 1], [], []>} : vector<16x128xbf16>, vector<128x128xbf16>, vector<16x128xf32> -> vector<16x128xf32>
    %c0_33 = arith.constant 0 : index
    %c0_34 = arith.constant 0 : index
    %c0_35 = arith.constant 0 : index
    %73 = vector.load %arg10[%c0_33, %c0_34, %c0_35] : memref<1x1x128xf32, #tpu.memory_space<vmem>>, vector<1x1x128xf32>
    %74 = vector.shape_cast %73 : vector<1x1x128xf32> to vector<1x128xf32>
    %75 = vector.broadcast %74 : vector<1x128xf32> to vector<16x128xf32>
    %76 = arith.addf %72, %75 : vector<16x128xf32>
    %77 = arith.addf %3, %76 : vector<16x128xf32>
    %c0_36 = arith.constant 0 : index
    %c0_37 = arith.constant 0 : index
    %c0_38 = arith.constant 0 : index
    %78 = vector.load %arg11[%c0_36, %c0_37, %c0_38] : memref<1x1x128xf32, #tpu.memory_space<vmem>>, vector<1x1x128xf32>
    %79 = vector.shape_cast %78 : vector<1x1x128xf32> to vector<1x128xf32>
    %c0_39 = arith.constant 0 : index
    %c0_40 = arith.constant 0 : index
    %c0_41 = arith.constant 0 : index
    %80 = vector.load %arg12[%c0_39, %c0_40, %c0_41] : memref<1x1x128xf32, #tpu.memory_space<vmem>>, vector<1x1x128xf32>
    %81 = vector.shape_cast %80 : vector<1x1x128xf32> to vector<1x128xf32>
    %cst_42 = arith.constant dense<0.000000e+00> : vector<16xf32>
    %82 = vector.multi_reduction <add>, %77, %cst_42 [1] : vector<16x128xf32> to vector<16xf32>
    %83 = vector.shape_cast %82 : vector<16xf32> to vector<16x1xf32>
    %cst_43 = arith.constant 1.280000e+02 : f32
    %84 = vector.broadcast %cst_43 : f32 to vector<16x1xf32>
    %85 = arith.divf %83, %84 : vector<16x1xf32>
    %86 = vector.broadcast %85 : vector<16x1xf32> to vector<16x128xf32>
    %87 = arith.subf %77, %86 : vector<16x128xf32>
    %88 = arith.mulf %87, %87 : vector<16x128xf32>
    %cst_44 = arith.constant dense<0.000000e+00> : vector<16xf32>
    %89 = vector.multi_reduction <add>, %88, %cst_44 [1] : vector<16x128xf32> to vector<16xf32>
    %90 = vector.shape_cast %89 : vector<16xf32> to vector<16x1xf32>
    %cst_45 = arith.constant 1.280000e+02 : f32
    %91 = vector.broadcast %cst_45 : f32 to vector<16x1xf32>
    %92 = arith.divf %90, %91 : vector<16x1xf32>
    %93 = vector.broadcast %85 : vector<16x1xf32> to vector<16x128xf32>
    %94 = arith.subf %77, %93 : vector<16x128xf32>
    %cst_46 = arith.constant 9.99999974E-6 : f32
    %95 = vector.broadcast %cst_46 : f32 to vector<16x1xf32>
    %96 = arith.addf %92, %95 : vector<16x1xf32>
    %97 = math.rsqrt %96 : vector<16x1xf32>
    %98 = vector.broadcast %97 : vector<16x1xf32> to vector<16x128xf32>
    %99 = arith.mulf %94, %98 : vector<16x128xf32>
    %100 = vector.broadcast %79 : vector<1x128xf32> to vector<16x128xf32>
    %101 = arith.mulf %99, %100 : vector<16x128xf32>
    %102 = vector.broadcast %81 : vector<1x128xf32> to vector<16x128xf32>
    %103 = arith.addf %101, %102 : vector<16x128xf32>
    %104 = arith.truncf %103 : vector<16x128xf32> to vector<16x128xbf16>
    %c0_47 = arith.constant 0 : index
    %c0_48 = arith.constant 0 : index
    %c0_49 = arith.constant 0 : index
    %105 = vector.load %arg13[%c0_47, %c0_48, %c0_49] : memref<1x128x256xbf16, #tpu.memory_space<vmem>>, vector<1x128x256xbf16>
    %106 = vector.shape_cast %105 : vector<1x128x256xbf16> to vector<128x256xbf16>
    %cst_50 = arith.constant dense<0.000000e+00> : vector<16x256xf32>
    %107 = tpu.matmul %104, %106, %cst_50 {dimension_numbers = #tpu.dot_dimension_numbers<[1], [0], [0], [1], [0, 0, 1, 1], [], []>} : vector<16x128xbf16>, vector<128x256xbf16>, vector<16x256xf32> -> vector<16x256xf32>
    %c0_51 = arith.constant 0 : index
    %c0_52 = arith.constant 0 : index
    %c0_53 = arith.constant 0 : index
    %108 = vector.load %arg14[%c0_51, %c0_52, %c0_53] : memref<1x1x256xf32, #tpu.memory_space<vmem>>, vector<1x1x256xf32>
    %109 = vector.shape_cast %108 : vector<1x1x256xf32> to vector<1x256xf32>
    %110 = vector.broadcast %109 : vector<1x256xf32> to vector<16x256xf32>
    %111 = arith.addf %107, %110 : vector<16x256xf32>
    %cst_54 = arith.constant 0.000000e+00 : f32
    %112 = vector.broadcast %cst_54 : f32 to vector<16x256xf32>
    %113 = arith.maximumf %111, %112 : vector<16x256xf32>
    %114 = arith.truncf %113 : vector<16x256xf32> to vector<16x256xbf16>
    %c0_55 = arith.constant 0 : index
    %c0_56 = arith.constant 0 : index
    %c0_57 = arith.constant 0 : index
    %115 = vector.load %arg15[%c0_55, %c0_56, %c0_57] : memref<1x256x128xbf16, #tpu.memory_space<vmem>>, vector<1x256x128xbf16>
    %116 = vector.shape_cast %115 : vector<1x256x128xbf16> to vector<256x128xbf16>
    %cst_58 = arith.constant dense<0.000000e+00> : vector<16x128xf32>
    %117 = tpu.matmul %114, %116, %cst_58 {dimension_numbers = #tpu.dot_dimension_numbers<[1], [0], [0], [1], [0, 0, 1, 1], [], []>} : vector<16x256xbf16>, vector<256x128xbf16>, vector<16x128xf32> -> vector<16x128xf32>
    %c0_59 = arith.constant 0 : index
    %c0_60 = arith.constant 0 : index
    %c0_61 = arith.constant 0 : index
    %118 = vector.load %arg16[%c0_59, %c0_60, %c0_61] : memref<1x1x128xf32, #tpu.memory_space<vmem>>, vector<1x1x128xf32>
    %119 = vector.shape_cast %118 : vector<1x1x128xf32> to vector<1x128xf32>
    %120 = vector.broadcast %119 : vector<1x128xf32> to vector<16x128xf32>
    %121 = arith.addf %117, %120 : vector<16x128xf32>
    %122 = arith.addf %77, %121 : vector<16x128xf32>
    %c0_62 = arith.constant 0 : index
    %c0_63 = arith.constant 0 : index
    %123 = vector.load %arg21[%c0_62, %c0_63] : memref<16x128xf32, #tpu.memory_space<vmem>>, vector<16x128xf32>
    tpu.vector_store %arg21[%c0_62, %c0_63], %122 {strides = array<i32>} : memref<16x128xf32, #tpu.memory_space<vmem>>, vector<16x128xf32>,
    %c1_i32 = arith.constant 1 : i32
    %124 = arith.cmpi eq, %arg1, %c1_i32 : i32
    %125 = arith.extui %124 : i1 to i32
    %c0_i32_64 = arith.constant 0 : i32
    %126 = arith.cmpi ne, %125, %c0_i32_64 : i32
    scf.if %126 {
      %c0_65 = arith.constant 0 : index
      %c0_66 = arith.constant 0 : index
      %127 = vector.load %arg17[%c0_65, %c0_66] : memref<1x128xf32, #tpu.memory_space<vmem>>, vector<1x128xf32>
      %c0_67 = arith.constant 0 : index
      %c0_68 = arith.constant 0 : index
      %128 = vector.load %arg18[%c0_67, %c0_68] : memref<1x128xf32, #tpu.memory_space<vmem>>, vector<1x128xf32>
      %cst_69 = arith.constant dense<0.000000e+00> : vector<16xf32>
      %129 = vector.multi_reduction <add>, %122, %cst_69 [1] : vector<16x128xf32> to vector<16xf32>
      %130 = vector.shape_cast %129 : vector<16xf32> to vector<16x1xf32>
      %cst_70 = arith.constant 1.280000e+02 : f32
      %131 = vector.broadcast %cst_70 : f32 to vector<16x1xf32>
      %132 = arith.divf %130, %131 : vector<16x1xf32>
      %133 = vector.broadcast %132 : vector<16x1xf32> to vector<16x128xf32>
      %134 = arith.subf %122, %133 : vector<16x128xf32>
      %135 = arith.mulf %134, %134 : vector<16x128xf32>
      %cst_71 = arith.constant dense<0.000000e+00> : vector<16xf32>
      %136 = vector.multi_reduction <add>, %135, %cst_71 [1] : vector<16x128xf32> to vector<16xf32>
      %137 = vector.shape_cast %136 : vector<16xf32> to vector<16x1xf32>
      %cst_72 = arith.constant 1.280000e+02 : f32
      %138 = vector.broadcast %cst_72 : f32 to vector<16x1xf32>
      %139 = arith.divf %137, %138 : vector<16x1xf32>
      %140 = vector.broadcast %132 : vector<16x1xf32> to vector<16x128xf32>
      %141 = arith.subf %122, %140 : vector<16x128xf32>
      %cst_73 = arith.constant 9.99999974E-6 : f32
      %142 = vector.broadcast %cst_73 : f32 to vector<16x1xf32>
      %143 = arith.addf %139, %142 : vector<16x1xf32>
      %144 = math.rsqrt %143 : vector<16x1xf32>
      %145 = vector.broadcast %144 : vector<16x1xf32> to vector<16x128xf32>
      %146 = arith.mulf %141, %145 : vector<16x128xf32>
      %147 = vector.broadcast %127 : vector<1x128xf32> to vector<16x128xf32>
      %148 = arith.mulf %146, %147 : vector<16x128xf32>
      %149 = vector.broadcast %128 : vector<1x128xf32> to vector<16x128xf32>
      %150 = arith.addf %148, %149 : vector<16x128xf32>
      %151 = arith.truncf %150 : vector<16x128xf32> to vector<16x128xbf16>
      %c0_74 = arith.constant 0 : index
      %c0_75 = arith.constant 0 : index
      %152 = vector.load %arg19[%c0_74, %c0_75] : memref<128x512xbf16, #tpu.memory_space<vmem>>, vector<128x512xbf16>
      %cst_76 = arith.constant dense<0.000000e+00> : vector<16x512xf32>
      %153 = tpu.matmul %151, %152, %cst_76 {dimension_numbers = #tpu.dot_dimension_numbers<[1], [0], [0], [1], [0, 0, 1, 1], [], []>} : vector<16x128xbf16>, vector<128x512xbf16>, vector<16x512xf32> -> vector<16x512xf32>
      %c0_77 = arith.constant 0 : index
      %c0_78 = arith.constant 0 : index
      %c0_79 = arith.constant 0 : index
      %154 = vector.load %arg20[%c0_77, %c0_78, %c0_79] : memref<1x16x512xf32, #tpu.memory_space<vmem>>, vector<1x16x512xf32>
      %155 = vector.shape_cast %154 : vector<1x16x512xf32> to vector<16x512xf32>
      %156 = vector.shape_cast %153 : vector<16x512xf32> to vector<1x16x512xf32>
      tpu.vector_store %arg20[%c0_77, %c0_78, %c0_79], %156 {strides = array<i32>} : memref<1x16x512xf32, #tpu.memory_space<vmem>>, vector<1x16x512xf32>,
    } else {
    }
    return
  }
  func.func @transform_0(%arg0: i32, %arg1: i32) -> (i32, i32, i32) {
    %c0_i32 = arith.constant 0 : i32
    %c0_i32_0 = arith.constant 0 : i32
    %c0_i32_1 = arith.constant 0 : i32
    return %arg0, %c0_i32, %c0_i32_0 : i32, i32, i32
  }
  func.func @transform_1(%arg0: i32, %arg1: i32) -> (i32, i32) {
    %c0_i32 = arith.constant 0 : i32
    %c0_i32_0 = arith.constant 0 : i32
    %c0_i32_1 = arith.constant 0 : i32
    return %c0_i32, %c0_i32_0 : i32, i32
  }
  func.func @transform_2(%arg0: i32, %arg1: i32) -> (i32, i32, i32) {
    %c0_i32 = arith.constant 0 : i32
    %c0_i32_0 = arith.constant 0 : i32
    %c0_i32_1 = arith.constant 0 : i32
    %c0_i32_2 = arith.constant 0 : i32
    return %c0_i32, %c0_i32_0, %c0_i32_1 : i32, i32, i32
  }
  func.func @transform_3(%arg0: i32, %arg1: i32) -> (i32, i32, i32) {
    %c0_i32 = arith.constant 0 : i32
    %c0_i32_0 = arith.constant 0 : i32
    %c0_i32_1 = arith.constant 0 : i32
    return %arg1, %c0_i32, %c0_i32_0 : i32, i32, i32
  }
  func.func @transform_4(%arg0: i32, %arg1: i32) -> (i32, i32, i32) {
    %c0_i32 = arith.constant 0 : i32
    %c0_i32_0 = arith.constant 0 : i32
    %c0_i32_1 = arith.constant 0 : i32
    return %arg1, %c0_i32, %c0_i32_0 : i32, i32, i32
  }
  func.func @transform_5(%arg0: i32, %arg1: i32) -> (i32, i32, i32) {
    %c0_i32 = arith.constant 0 : i32
    %c0_i32_0 = arith.constant 0 : i32
    %c0_i32_1 = arith.constant 0 : i32
    return %arg1, %c0_i32, %c0_i32_0 : i32, i32, i32
  }
  func.func @transform_6(%arg0: i32, %arg1: i32) -> (i32, i32, i32) {
    %c0_i32 = arith.constant 0 : i32
    %c0_i32_0 = arith.constant 0 : i32
    %c0_i32_1 = arith.constant 0 : i32
    return %arg1, %c0_i32, %c0_i32_0 : i32, i32, i32
  }
  func.func @transform_7(%arg0: i32, %arg1: i32) -> (i32, i32, i32) {
    %c0_i32 = arith.constant 0 : i32
    %c0_i32_0 = arith.constant 0 : i32
    %c0_i32_1 = arith.constant 0 : i32
    return %arg1, %c0_i32, %c0_i32_0 : i32, i32, i32
  }
  func.func @transform_8(%arg0: i32, %arg1: i32) -> (i32, i32, i32) {
    %c0_i32 = arith.constant 0 : i32
    %c0_i32_0 = arith.constant 0 : i32
    %c0_i32_1 = arith.constant 0 : i32
    return %arg1, %c0_i32, %c0_i32_0 : i32, i32, i32
  }
  func.func @transform_9(%arg0: i32, %arg1: i32) -> (i32, i32, i32) {
    %c0_i32 = arith.constant 0 : i32
    %c0_i32_0 = arith.constant 0 : i32
    %c0_i32_1 = arith.constant 0 : i32
    return %arg1, %c0_i32, %c0_i32_0 : i32, i32, i32
  }
  func.func @transform_10(%arg0: i32, %arg1: i32) -> (i32, i32, i32) {
    %c0_i32 = arith.constant 0 : i32
    %c0_i32_0 = arith.constant 0 : i32
    %c0_i32_1 = arith.constant 0 : i32
    return %arg1, %c0_i32, %c0_i32_0 : i32, i32, i32
  }
  func.func @transform_11(%arg0: i32, %arg1: i32) -> (i32, i32, i32) {
    %c0_i32 = arith.constant 0 : i32
    %c0_i32_0 = arith.constant 0 : i32
    %c0_i32_1 = arith.constant 0 : i32
    return %arg1, %c0_i32, %c0_i32_0 : i32, i32, i32
  }
  func.func @transform_12(%arg0: i32, %arg1: i32) -> (i32, i32, i32) {
    %c0_i32 = arith.constant 0 : i32
    %c0_i32_0 = arith.constant 0 : i32
    %c0_i32_1 = arith.constant 0 : i32
    return %arg1, %c0_i32, %c0_i32_0 : i32, i32, i32
  }
  func.func @transform_13(%arg0: i32, %arg1: i32) -> (i32, i32, i32) {
    %c0_i32 = arith.constant 0 : i32
    %c0_i32_0 = arith.constant 0 : i32
    %c0_i32_1 = arith.constant 0 : i32
    return %arg1, %c0_i32, %c0_i32_0 : i32, i32, i32
  }
  func.func @transform_14(%arg0: i32, %arg1: i32) -> (i32, i32, i32) {
    %c0_i32 = arith.constant 0 : i32
    %c0_i32_0 = arith.constant 0 : i32
    %c0_i32_1 = arith.constant 0 : i32
    return %arg1, %c0_i32, %c0_i32_0 : i32, i32, i32
  }
  func.func @transform_15(%arg0: i32, %arg1: i32) -> (i32, i32) {
    %c0_i32 = arith.constant 0 : i32
    %c0_i32_0 = arith.constant 0 : i32
    %c0_i32_1 = arith.constant 0 : i32
    return %c0_i32, %c0_i32_0 : i32, i32
  }
  func.func @transform_16(%arg0: i32, %arg1: i32) -> (i32, i32) {
    %c0_i32 = arith.constant 0 : i32
    %c0_i32_0 = arith.constant 0 : i32
    %c0_i32_1 = arith.constant 0 : i32
    return %c0_i32, %c0_i32_0 : i32, i32
  }
  func.func @transform_17(%arg0: i32, %arg1: i32) -> (i32, i32) {
    %c0_i32 = arith.constant 0 : i32
    %c0_i32_0 = arith.constant 0 : i32
    %c0_i32_1 = arith.constant 0 : i32
    return %c0_i32, %c0_i32_0 : i32, i32
  }
  func.func @transform_18(%arg0: i32, %arg1: i32) -> (i32, i32, i32) {
    %c0_i32 = arith.constant 0 : i32
    %c0_i32_0 = arith.constant 0 : i32
    %c0_i32_1 = arith.constant 0 : i32
    return %arg0, %c0_i32, %c0_i32_0 : i32, i32, i32
  }
}

</mosaic_0001>

<llo_original>
// kernel: opt_forward.1
$region0: #{opt_forward.1}
  #allocation0 [shape = 'u32[]', space=smem, size = 0x4, offset = 0x4, fixed_abs, tag = 'smem constant byte address 0x4 - core index']
  #allocation1 [shape = 'u32[72,128]{1,0:T(1,128)}', space=vmem, size = 0x9000, scoped, tag = 'internal scratch']
  #allocation2 [shape = 'f32[16,128]{1,0:T(8,128)}', space=vmem, size = 0x2000, scoped, tag = 'scratch operand']
  %s0 = inlined_call_operand.vmem [shape: f32[2,16,128], index: 0, kind: input, shape index: {}]
  %s1 = inlined_call_operand.vmem [shape: f32[64,16], index: 1, kind: input, shape index: {}]
  %s2 = inlined_call_operand.vmem [shape: f32[4,1,128], index: 2, kind: input, shape index: {}]
  %s3 = inlined_call_operand.vmem [shape: f32[2,1,128], index: 3, kind: input, shape index: {}]
  %s4 = inlined_call_operand.vmem [shape: f32[2,1,128], index: 4, kind: input, shape index: {}]
  %s5 = inlined_call_operand.vmem [shape: bf16[2,128,384], index: 5, kind: input, shape index: {}]
  %s6 = inlined_call_operand.vmem [shape: f32[2,1,384], index: 6, kind: input, shape index: {}]
  %s7 = inlined_call_operand.hbm [shape: bf16[2,128,128], index: 7, kind: input, shape index: {}]
  %s8 = inlined_call_operand.vmem [shape: f32[2,1,128], index: 8, kind: input, shape index: {}]
  %s9 = inlined_call_operand.vmem [shape: f32[2,1,128], index: 9, kind: input, shape index: {}]
  %s10 = inlined_call_operand.vmem [shape: f32[2,1,128], index: 10, kind: input, shape index: {}]
  %s11 = inlined_call_operand.vmem [shape: bf16[2,128,256], index: 11, kind: input, shape index: {}]
  %s12 = inlined_call_operand.vmem [shape: f32[2,1,256], index: 12, kind: input, shape index: {}]
  %s13 = inlined_call_operand.hbm [shape: bf16[2,256,128], index: 13, kind: input, shape index: {}]
  %s14 = inlined_call_operand.vmem [shape: f32[2,1,128], index: 14, kind: input, shape index: {}]
  %s15 = inlined_call_operand.vmem [shape: f32[1,128], index: 15, kind: input, shape index: {}]
  %s16 = inlined_call_operand.vmem [shape: f32[1,128], index: 16, kind: input, shape index: {}]
  %s17 = inlined_call_operand.hbm [shape: bf16[128,512], index: 17, kind: input, shape index: {}]
  %s18 = inlined_call_operand.hbm [shape: f32[2,16,512], index: 18, kind: output, shape index: {}]
  %s19 = sld [smem:[#allocation0]]
  $region125: #{opt_forward.1} parent=0
    _
  %s21 = ssub.s32 1, %s19
  %s22 = scalar_select 0, %s21, %s19
  $region1: #{opt_forward.1} parent=0
    #allocation3 [shape = 'u8[65536]{0}', space=vmem, size = 0x10000, scoped, tag = 'input window, operand 7']
    #allocation4 [shape = 's32[2]{0}', space=sflag, size = 0x8, scoped, tag = 'scoped memory for opt_forward.1']
    #allocation5 [shape = 's32[2]{0}', space=sflag, size = 0x8, scoped, tag = 'scoped memory for opt_forward.1']
    #allocation6 [shape = 'u8[131072]{0}', space=vmem, size = 0x20000, scoped, tag = 'input window, operand 13']
    #allocation7 [shape = 's32[2]{0}', space=sflag, size = 0x8, scoped, tag = 'scoped memory for opt_forward.1']
    #allocation8 [shape = 'u8[131072]{0}', space=vmem, size = 0x20000, scoped, tag = 'input window, operand 17, single buffered']
    #allocation9 [shape = 'u8[65536]{0}', space=vmem, size = 0x10000, scoped, tag = 'output window, operand 0']
    %23 = vsyncpa [#allocation4], 0
    %s24 = scalar_lea.sflag [#allocation4], 1
    %25 = vsyncpa %s24, 0
    %26 = vsyncpa [#allocation7], 0
    %s27 = scalar_lea.sflag [#allocation7], 1
    %28 = vsyncpa %s27, 0
    %29 = vsyncpa [#allocation5], 0
    %s30 = scalar_lea.sflag [#allocation5], 1
    %31 = vsyncpa %s30, 0
    loop: start=0, step=1, limit=6
    $region2: #{opt_forward.1} parent=1 // loop_pre_header
      _
    $region3: #{opt_forward.1} parent=1 // loop_header
      %s33 = sphi 0, %s37
      %p34 = scmp.ge.s32.totalorder %s33, 6
      %s40 = sphi 0, %s52
      %s41 = sphi 0, %s48
      %s42 = sphi 0, %s40
      %s43 = sphi 0, %s41
      %s44 = sphi 0, %s42
      %s45 = sphi 0, %s43
      %s55 = sphi 0, %s57
      %s58 = sphi 0, %s55
      %s59 = sphi 0, %s58
      %s75 = sphi 0, %s59
      %s79 = sphi 0, %s79
      %s81 = sphi 0, %s79
      %s82 = sphi 0, %s81
      %s96 = sphi 0, %s82
      %s100 = sphi 0, %s100
      %s102 = sphi 0, %s100
      %s103 = sphi 0, %s102
      %s117 = sphi 0, %s103
      %s123 = sphi 0, %s125
      %s126 = sphi 0, %s123
      %s127 = sphi 0, %s126
      %s143 = sphi 0, %s127
      %s149 = sphi 0, %s151
      %s152 = sphi 0, %s149
      %s153 = sphi 0, %s152
      %s169 = sphi 0, %s153
      %s175 = sphi 0, %s177
      %s178 = sphi 0, %s175
      %s179 = sphi 0, %s178
      %s195 = sphi 0, %s179
      %s201 = sphi 0, %s203
      %s204 = sphi 0, %s201
      %s205 = sphi 0, %s204
      %s221 = sphi 0, %s205
      %s227 = sphi 0, %s229
      %s230 = sphi 0, %s227
      %s231 = sphi 0, %s230
      %s247 = sphi 0, %s231
      %s253 = sphi 0, %s255
      %s256 = sphi 0, %s253
      %s257 = sphi 0, %s256
      %s273 = sphi 0, %s257
      %s279 = sphi 0, %s281
      %s282 = sphi 0, %s279
      %s283 = sphi 0, %s282
      %s299 = sphi 0, %s283
      %s305 = sphi 0, %s307
      %s308 = sphi 0, %s305
      %s309 = sphi 0, %s308
      %s325 = sphi 0, %s309
      %s331 = sphi 0, %s333
      %s334 = sphi 0, %s331
      %s335 = sphi 0, %s334
      %s351 = sphi 0, %s335
      %s357 = sphi 0, %s359
      %s360 = sphi 0, %s357
      %s361 = sphi 0, %s360
      %s377 = sphi 0, %s361
      %s383 = sphi 0, %s385
      %s386 = sphi 0, %s383
      %s387 = sphi 0, %s386
      %s403 = sphi 0, %s387
      %s409 = sphi 0, %s411
      %s412 = sphi 0, %s409
      %s413 = sphi 0, %s412
      %s429 = sphi 0, %s413
      %s433 = sphi 0, %s433
      %s435 = sphi 0, %s433
      %s436 = sphi 0, %s435
      %s450 = sphi 0, %s436
      %s454 = sphi 0, %s454
      %s456 = sphi 0, %s454
      %s457 = sphi 0, %s456
      %s471 = sphi 0, %s457
      %s475 = sphi 0, %s475
      %s477 = sphi 0, %s475
      %s478 = sphi 0, %s477
      %s492 = sphi 0, %s478
      %s498 = sphi 0, %s500
      %s501 = sphi 0, %s498
      %s502 = sphi 0, %s501
      %s518 = sphi 0, %s502
    $region4: #{opt_forward.1} parent=1 // loop_header_branch
      %36 = sbr.rel (%p34) target = $region8
    $region5: #{opt_forward.1} parent=1 // loop_body
      %s38 = ssub.s32 %s33, 1
      %s39 = ssub.s32 %s33, 2
      %s46 = sadd.s32 1, %s41
      %p47 = scmp.ge.s32.totalorder %s46, 2
      %s48 = scalar_select %p47, 0, %s46
      %s49 = sadd.s32 1, %s40
      %s50 = scalar_select %p47, %s49, %s40
      %p51 = scmp.ge.s32.totalorder %s50, 2
      %s52 = scalar_select %p51, 0, %s50
      %s53 = ssub.s32 %s40, %s52
      %p54 = scmp.eq.s32.totalorder %s53, 0
      %s56 = sadd.s32 %s55, 1
      %s57 = scalar_select %p54, %s55, %s56
      %p60 = pneg %p54
      %p61 = scmp.eq.s32.totalorder %s33, 3
      %p62 = por %p60, %p61
      %p63 = scmp.ne.s32.totalorder %s55, %s58
      %p64 = scmp.eq.s32.totalorder %s33, 0
      %p65 = por %p63, %p64
      %p66 = scmp.ne.s32.totalorder %s55, %s58
      %p67 = scmp.eq.s32.totalorder %s38, 3
      %p68 = por %p66, %p67
      %p69 = scmp.ne.s32.totalorder %s58, %s59
      %p70 = scmp.eq.s32.totalorder %s38, 0
      %p71 = por %p69, %p70
      %p72 = scmp.ne.s32.totalorder %s58, %s59
      %p73 = scmp.eq.s32.totalorder %s39, 3
      %p74 = por %p72, %p73
      %p76 = scmp.ne.s32.totalorder %s59, %s75
      %p77 = scmp.eq.s32.totalorder %s39, 0
      %p78 = por %p76, %p77
      %s80 = sadd.s32 %s79, 1
      %p83 = scmp.eq.s32.totalorder %s33, 3
      %p84 = scmp.ne.s32.totalorder %s79, %s81
      %p85 = scmp.eq.s32.totalorder %s33, 0
      %p86 = por %p84, %p85
      %p87 = scmp.ne.s32.totalorder %s79, %s81
      %p88 = scmp.eq.s32.totalorder %s38, 3
      %p89 = por %p87, %p88
      %p90 = scmp.ne.s32.totalorder %s81, %s82
      %p91 = scmp.eq.s32.totalorder %s38, 0
      %p92 = por %p90, %p91
      %p93 = scmp.ne.s32.totalorder %s81, %s82
      %p94 = scmp.eq.s32.totalorder %s39, 3
      %p95 = por %p93, %p94
      %p97 = scmp.ne.s32.totalorder %s82, %s96
      %p98 = scmp.eq.s32.totalorder %s39, 0
      %p99 = por %p97, %p98
      %s101 = sadd.s32 %s100, 1
      %p104 = scmp.eq.s32.totalorder %s33, 3
      %p105 = scmp.ne.s32.totalorder %s100, %s102
      %p106 = scmp.eq.s32.totalorder %s33, 0
      %p107 = por %p105, %p106
      %p108 = scmp.ne.s32.totalorder %s100, %s102
      %p109 = scmp.eq.s32.totalorder %s38, 3
      %p110 = por %p108, %p109
      %p111 = scmp.ne.s32.totalorder %s102, %s103
      %p112 = scmp.eq.s32.totalorder %s38, 0
      %p113 = por %p111, %p112
      %p114 = scmp.ne.s32.totalorder %s102, %s103
      %p115 = scmp.eq.s32.totalorder %s39, 3
      %p116 = por %p114, %p115
      %p118 = scmp.ne.s32.totalorder %s103, %s117
      %p119 = scmp.eq.s32.totalorder %s39, 0
      %p120 = por %p118, %p119
      %s121 = ssub.s32 %s41, %s48
      %p122 = scmp.eq.s32.totalorder %s121, 0
      %s124 = sadd.s32 %s123, 1
      %s125 = scalar_select %p122, %s123, %s124
      %p128 = pneg %p122
      %p129 = scmp.eq.s32.totalorder %s33, 3
      %p130 = por %p128, %p129
      %p131 = scmp.ne.s32.totalorder %s123, %s126
      %p132 = scmp.eq.s32.totalorder %s33, 0
      %p133 = por %p131, %p132
      %p134 = scmp.ne.s32.totalorder %s123, %s126
      %p135 = scmp.eq.s32.totalorder %s38, 3
      %p136 = por %p134, %p135
      %p137 = scmp.ne.s32.totalorder %s126, %s127
      %p138 = scmp.eq.s32.totalorder %s38, 0
      %p139 = por %p137, %p138
      %p140 = scmp.ne.s32.totalorder %s126, %s127
      %p141 = scmp.eq.s32.totalorder %s39, 3
      %p142 = por %p140, %p141
      %p144 = scmp.ne.s32.totalorder %s127, %s143
      %p145 = scmp.eq.s32.totalorder %s39, 0
      %p146 = por %p144, %p145
      %s147 = ssub.s32 %s41, %s48
      %p148 = scmp.eq.s32.totalorder %s147, 0
      %s150 = sadd.s32 %s149, 1
      %s151 = scalar_select %p148, %s149, %s150
      %p154 = pneg %p148
      %p155 = scmp.eq.s32.totalorder %s33, 3
      %p156 = por %p154, %p155
      %p157 = scmp.ne.s32.totalorder %s149, %s152
      %p158 = scmp.eq.s32.totalorder %s33, 0
      %p159 = por %p157, %p158
      %p160 = scmp.ne.s32.totalorder %s149, %s152
      %p161 = scmp.eq.s32.totalorder %s38, 3
      %p162 = por %p160, %p161
      %p163 = scmp.ne.s32.totalorder %s152, %s153
      %p164 = scmp.eq.s32.totalorder %s38, 0
      %p165 = por %p163, %p164
      %p166 = scmp.ne.s32.totalorder %s152, %s153
      %p167 = scmp.eq.s32.totalorder %s39, 3
      %p168 = por %p166, %p167
      %p170 = scmp.ne.s32.totalorder %s153, %s169
      %p171 = scmp.eq.s32.totalorder %s39, 0
      %p172 = por %p170, %p171
      %s173 = ssub.s32 %s41, %s48
      %p174 = scmp.eq.s32.totalorder %s173, 0
      %s176 = sadd.s32 %s175, 1
      %s177 = scalar_select %p174, %s175, %s176
      %p180 = pneg %p174
      %p181 = scmp.eq.s32.totalorder %s33, 3
      %p182 = por %p180, %p181
      %p183 = scmp.ne.s32.totalorder %s175, %s178
      %p184 = scmp.eq.s32.totalorder %s33, 0
      %p185 = por %p183, %p184
      %p186 = scmp.ne.s32.totalorder %s175, %s178
      %p187 = scmp.eq.s32.totalorder %s38, 3
      %p188 = por %p186, %p187
      %p189 = scmp.ne.s32.totalorder %s178, %s179
      %p190 = scmp.eq.s32.totalorder %s38, 0
      %p191 = por %p189, %p190
      %p192 = scmp.ne.s32.totalorder %s178, %s179
      %p193 = scmp.eq.s32.totalorder %s39, 3
      %p194 = por %p192, %p193
      %p196 = scmp.ne.s32.totalorder %s179, %s195
      %p197 = scmp.eq.s32.totalorder %s39, 0
      %p198 = por %p196, %p197
      %s199 = ssub.s32 %s41, %s48
      %p200 = scmp.eq.s32.totalorder %s199, 0
      %s202 = sadd.s32 %s201, 1
      %s203 = scalar_select %p200, %s201, %s202
      %p206 = pneg %p200
      %p207 = scmp.eq.s32.totalorder %s33, 3
      %p208 = por %p206, %p207
      %p209 = scmp.ne.s32.totalorder %s201, %s204
      %p210 = scmp.eq.s32.totalorder %s33, 0
      %p211 = por %p209, %p210
      %p212 = scmp.ne.s32.totalorder %s201, %s204
      %p213 = scmp.eq.s32.totalorder %s38, 3
      %p214 = por %p212, %p213
      %p215 = scmp.ne.s32.totalorder %s204, %s205
      %p216 = scmp.eq.s32.totalorder %s38, 0
      %p217 = por %p215, %p216
      %p218 = scmp.ne.s32.totalorder %s204, %s205
      %p219 = scmp.eq.s32.totalorder %s39, 3
      %p220 = por %p218, %p219
      %p222 = scmp.ne.s32.totalorder %s205, %s221
      %p223 = scmp.eq.s32.totalorder %s39, 0
      %p224 = por %p222, %p223
      %s225 = ssub.s32 %s41, %s48
      %p226 = scmp.eq.s32.totalorder %s225, 0
      %s228 = sadd.s32 %s227, 1
      %s229 = scalar_select %p226, %s227, %s228
      %p232 = pneg %p226
      %p233 = scmp.eq.s32.totalorder %s33, 3
      %p234 = por %p232, %p233
      %p235 = scmp.ne.s32.totalorder %s227, %s230
      %p236 = scmp.eq.s32.totalorder %s33, 0
      %p237 = por %p235, %p236
      %p238 = scmp.ne.s32.totalorder %s227, %s230
      %p239 = scmp.eq.s32.totalorder %s38, 3
      %p240 = por %p238, %p239
      %p241 = scmp.ne.s32.totalorder %s230, %s231
      %p242 = scmp.eq.s32.totalorder %s38, 0
      %p243 = por %p241, %p242
      %p244 = scmp.ne.s32.totalorder %s230, %s231
      %p245 = scmp.eq.s32.totalorder %s39, 3
      %p246 = por %p244, %p245
      %p248 = scmp.ne.s32.totalorder %s231, %s247
      %p249 = scmp.eq.s32.totalorder %s39, 0
      %p250 = por %p248, %p249
      %s251 = ssub.s32 %s41, %s48
      %p252 = scmp.eq.s32.totalorder %s251, 0
      %s254 = sadd.s32 %s253, 1
      %s255 = scalar_select %p252, %s253, %s254
      %p258 = pneg %p252
      %p259 = scmp.eq.s32.totalorder %s33, 3
      %p260 = por %p258, %p259
      %p261 = scmp.ne.s32.totalorder %s253, %s256
      %p262 = scmp.eq.s32.totalorder %s33, 0
      %p263 = por %p261, %p262
      %p264 = scmp.ne.s32.totalorder %s253, %s256
      %p265 = scmp.eq.s32.totalorder %s38, 3
      %p266 = por %p264, %p265
      %p267 = scmp.ne.s32.totalorder %s256, %s257
      %p268 = scmp.eq.s32.totalorder %s38, 0
      %p269 = por %p267, %p268
      %p270 = scmp.ne.s32.totalorder %s256, %s257
      %p271 = scmp.eq.s32.totalorder %s39, 3
      %p272 = por %p270, %p271
      %p274 = scmp.ne.s32.totalorder %s257, %s273
      %p275 = scmp.eq.s32.totalorder %s39, 0
      %p276 = por %p274, %p275
      %s277 = ssub.s32 %s41, %s48
      %p278 = scmp.eq.s32.totalorder %s277, 0
      %s280 = sadd.s32 %s279, 1
      %s281 = scalar_select %p278, %s279, %s280
      %p284 = pneg %p278
      %p285 = scmp.eq.s32.totalorder %s33, 3
      %p286 = por %p284, %p285
      %p287 = scmp.ne.s32.totalorder %s279, %s282
      %p288 = scmp.eq.s32.totalorder %s33, 0
      %p289 = por %p287, %p288
      %p290 = scmp.ne.s32.totalorder %s279, %s282
      %p291 = scmp.eq.s32.totalorder %s38, 3
      %p292 = por %p290, %p291
      %p293 = scmp.ne.s32.totalorder %s282, %s283
      %p294 = scmp.eq.s32.totalorder %s38, 0
      %p295 = por %p293, %p294
      %p296 = scmp.ne.s32.totalorder %s282, %s283
      %p297 = scmp.eq.s32.totalorder %s39, 3
      %p298 = por %p296, %p297
      %p300 = scmp.ne.s32.totalorder %s283, %s299
      %p301 = scmp.eq.s32.totalorder %s39, 0
      %p302 = por %p300, %p301
      %s303 = ssub.s32 %s41, %s48
      %p304 = scmp.eq.s32.totalorder %s303, 0
      %s306 = sadd.s32 %s305, 1
      %s307 = scalar_select %p304, %s305, %s306
      %p310 = pneg %p304
      %p311 = scmp.eq.s32.totalorder %s33, 3
      %p312 = por %p310, %p311
      %p313 = scmp.ne.s32.totalorder %s305, %s308
      %p314 = scmp.eq.s32.totalorder %s33, 0
      %p315 = por %p313, %p314
      %p316 = scmp.ne.s32.totalorder %s305, %s308
      %p317 = scmp.eq.s32.totalorder %s38, 3
      %p318 = por %p316, %p317
      %p319 = scmp.ne.s32.totalorder %s308, %s309
      %p320 = scmp.eq.s32.totalorder %s38, 0
      %p321 = por %p319, %p320
      %p322 = scmp.ne.s32.totalorder %s308, %s309
      %p323 = scmp.eq.s32.totalorder %s39, 3
      %p324 = por %p322, %p323
      %p326 = scmp.ne.s32.totalorder %s309, %s325
      %p327 = scmp.eq.s32.totalorder %s39, 0
      %p328 = por %p326, %p327
      %s329 = ssub.s32 %s41, %s48
      %p330 = scmp.eq.s32.totalorder %s329, 0
      %s332 = sadd.s32 %s331, 1
      %s333 = scalar_select %p330, %s331, %s332
      %p336 = pneg %p330
      %p337 = scmp.eq.s32.totalorder %s33, 3
      %p338 = por %p336, %p337
      %p339 = scmp.ne.s32.totalorder %s331, %s334
      %p340 = scmp.eq.s32.totalorder %s33, 0
      %p341 = por %p339, %p340
      %p342 = scmp.ne.s32.totalorder %s331, %s334
      %p343 = scmp.eq.s32.totalorder %s38, 3
      %p344 = por %p342, %p343
      %p345 = scmp.ne.s32.totalorder %s334, %s335
      %p346 = scmp.eq.s32.totalorder %s38, 0
      %p347 = por %p345, %p346
      %p348 = scmp.ne.s32.totalorder %s334, %s335
      %p349 = scmp.eq.s32.totalorder %s39, 3
      %p350 = por %p348, %p349
      %p352 = scmp.ne.s32.totalorder %s335, %s351
      %p353 = scmp.eq.s32.totalorder %s39, 0
      %p354 = por %p352, %p353
      %s355 = ssub.s32 %s41, %s48
      %p356 = scmp.eq.s32.totalorder %s355, 0
      %s358 = sadd.s32 %s357, 1
      %s359 = scalar_select %p356, %s357, %s358
      %p362 = pneg %p356
      %p363 = scmp.eq.s32.totalorder %s33, 3
      %p364 = por %p362, %p363
      %p365 = scmp.ne.s32.totalorder %s357, %s360
      %p366 = scmp.eq.s32.totalorder %s33, 0
      %p367 = por %p365, %p366
      %p368 = scmp.ne.s32.totalorder %s357, %s360
      %p369 = scmp.eq.s32.totalorder %s38, 3
      %p370 = por %p368, %p369
      %p371 = scmp.ne.s32.totalorder %s360, %s361
      %p372 = scmp.eq.s32.totalorder %s38, 0
      %p373 = por %p371, %p372
      %p374 = scmp.ne.s32.totalorder %s360, %s361
      %p375 = scmp.eq.s32.totalorder %s39, 3
      %p376 = por %p374, %p375
      %p378 = scmp.ne.s32.totalorder %s361, %s377
      %p379 = scmp.eq.s32.totalorder %s39, 0
      %p380 = por %p378, %p379
      %s381 = ssub.s32 %s41, %s48
      %p382 = scmp.eq.s32.totalorder %s381, 0
      %s384 = sadd.s32 %s383, 1
      %s385 = scalar_select %p382, %s383, %s384
      %p388 = pneg %p382
      %p389 = scmp.eq.s32.totalorder %s33, 3
      %p390 = por %p388, %p389
      %p391 = scmp.ne.s32.totalorder %s383, %s386
      %p392 = scmp.eq.s32.totalorder %s33, 0
      %p393 = por %p391, %p392
      %p394 = scmp.ne.s32.totalorder %s383, %s386
      %p395 = scmp.eq.s32.totalorder %s38, 3
      %p396 = por %p394, %p395
      %p397 = scmp.ne.s32.totalorder %s386, %s387
      %p398 = scmp.eq.s32.totalorder %s38, 0
      %p399 = por %p397, %p398
      %p400 = scmp.ne.s32.totalorder %s386, %s387
      %p401 = scmp.eq.s32.totalorder %s39, 3
      %p402 = por %p400, %p401
      %p404 = scmp.ne.s32.totalorder %s387, %s403
      %p405 = scmp.eq.s32.totalorder %s39, 0
      %p406 = por %p404, %p405
      %s407 = ssub.s32 %s41, %s48
      %p408 = scmp.eq.s32.totalorder %s407, 0
      %s410 = sadd.s32 %s409, 1
      %s411 = scalar_select %p408, %s409, %s410
      %p414 = pneg %p408
      %p415 = scmp.eq.s32.totalorder %s33, 3
      %p416 = por %p414, %p415
      %p417 = scmp.ne.s32.totalorder %s409, %s412
      %p418 = scmp.eq.s32.totalorder %s33, 0
      %p419 = por %p417, %p418
      %p420 = scmp.ne.s32.totalorder %s409, %s412
      %p421 = scmp.eq.s32.totalorder %s38, 3
      %p422 = por %p420, %p421
      %p423 = scmp.ne.s32.totalorder %s412, %s413
      %p424 = scmp.eq.s32.totalorder %s38, 0
      %p425 = por %p423, %p424
      %p426 = scmp.ne.s32.totalorder %s412, %s413
      %p427 = scmp.eq.s32.totalorder %s39, 3
      %p428 = por %p426, %p427
      %p430 = scmp.ne.s32.totalorder %s413, %s429
      %p431 = scmp.eq.s32.totalorder %s39, 0
      %p432 = por %p430, %p431
      %s434 = sadd.s32 %s433, 1
      %p437 = scmp.eq.s32.totalorder %s33, 3
      %p438 = scmp.ne.s32.totalorder %s433, %s435
      %p439 = scmp.eq.s32.totalorder %s33, 0
      %p440 = por %p438, %p439
      %p441 = scmp.ne.s32.totalorder %s433, %s435
      %p442 = scmp.eq.s32.totalorder %s38, 3
      %p443 = por %p441, %p442
      %p444 = scmp.ne.s32.totalorder %s435, %s436
      %p445 = scmp.eq.s32.totalorder %s38, 0
      %p446 = por %p444, %p445
      %p447 = scmp.ne.s32.totalorder %s435, %s436
      %p448 = scmp.eq.s32.totalorder %s39, 3
      %p449 = por %p447, %p448
      %p451 = scmp.ne.s32.totalorder %s436, %s450
      %p452 = scmp.eq.s32.totalorder %s39, 0
      %p453 = por %p451, %p452
      %s455 = sadd.s32 %s454, 1
      %p458 = scmp.eq.s32.totalorder %s33, 3
      %p459 = scmp.ne.s32.totalorder %s454, %s456
      %p460 = scmp.eq.s32.totalorder %s33, 0
      %p461 = por %p459, %p460
      %p462 = scmp.ne.s32.totalorder %s454, %s456
      %p463 = scmp.eq.s32.totalorder %s38, 3
      %p464 = por %p462, %p463
      %p465 = scmp.ne.s32.totalorder %s456, %s457
      %p466 = scmp.eq.s32.totalorder %s38, 0
      %p467 = por %p465, %p466
      %p468 = scmp.ne.s32.totalorder %s456, %s457
      %p469 = scmp.eq.s32.totalorder %s39, 3
      %p470 = por %p468, %p469
      %p472 = scmp.ne.s32.totalorder %s457, %s471
      %p473 = scmp.eq.s32.totalorder %s39, 0
      %p474 = por %p472, %p473
      %s476 = sadd.s32 %s475, 1
      %p479 = scmp.eq.s32.totalorder %s33, 3
      %p480 = scmp.ne.s32.totalorder %s475, %s477
      %p481 = scmp.eq.s32.totalorder %s33, 0
      %p482 = por %p480, %p481
      %p483 = scmp.ne.s32.totalorder %s475, %s477
      %p484 = scmp.eq.s32.totalorder %s38, 3
      %p485 = por %p483, %p484
      %p486 = scmp.ne.s32.totalorder %s477, %s478
      %p487 = scmp.eq.s32.totalorder %s38, 0
      %p488 = por %p486, %p487
      %p489 = scmp.ne.s32.totalorder %s477, %s478
      %p490 = scmp.eq.s32.totalorder %s39, 3
      %p491 = por %p489, %p490
      %p493 = scmp.ne.s32.totalorder %s478, %s492
      %p494 = scmp.eq.s32.totalorder %s39, 0
      %p495 = por %p493, %p494
      %s496 = ssub.s32 %s40, %s52
      %p497 = scmp.eq.s32.totalorder %s496, 0
      %s499 = sadd.s32 %s498, 1
      %s500 = scalar_select %p497, %s498, %s499
      %p503 = pneg %p497
      %p504 = scmp.eq.s32.totalorder %s33, 3
      %p505 = por %p503, %p504
      %p506 = scmp.ne.s32.totalorder %s498, %s501
      %p507 = scmp.eq.s32.totalorder %s33, 0
      %p508 = por %p506, %p507
      %p509 = scmp.ne.s32.totalorder %s498, %s501
      %p510 = scmp.eq.s32.totalorder %s38, 3
      %p511 = por %p509, %p510
      %p512 = scmp.ne.s32.totalorder %s501, %s502
      %p513 = scmp.eq.s32.totalorder %s38, 0
      %p514 = por %p512, %p513
      %p515 = scmp.ne.s32.totalorder %s501, %s502
      %p516 = scmp.eq.s32.totalorder %s39, 3
      %p517 = por %p515, %p516
      %p519 = scmp.ne.s32.totalorder %s502, %s518
      %p520 = scmp.eq.s32.totalorder %s39, 0
      %p521 = por %p519, %p520
      %p522 = scmp.le.s32.totalorder 1, %s33
      %p523 = scmp.lt.s32.totalorder %s33, 5
      %p524 = pnand %p522, %p523
      %p525 = pneg %p524
      // Predicated region
      $region9: #{opt_forward.1} parent=5 // pred_check
        _
      $region10: #{opt_forward.1} parent=5 // pred_check_branch
        %527 = sbr.rel (%p524) target = $region12
      $region11: #{opt_forward.1} parent=5 // pred_region
        %s528 = ssub.s32 %s33, 1
        // Predicated region
        $region13: #{opt_forward.1} parent=11 // pred_check
          %p529 = pneg %p92
        $region14: #{opt_forward.1} parent=11 // pred_check_branch
          %531 = sbr.rel (%p529) target = $region16
        $region15: #{opt_forward.1} parent=11 // pred_region
          _
        $region16: #{opt_forward.1} parent=11 // pred_fallthru
          _
        // Predicated region
        $region17: #{opt_forward.1} parent=11 // pred_check
          %p532 = pneg %p113
        $region18: #{opt_forward.1} parent=11 // pred_check_branch
          %534 = sbr.rel (%p532) target = $region20
        $region19: #{opt_forward.1} parent=11 // pred_region
          _
        $region20: #{opt_forward.1} parent=11 // pred_fallthru
          _
        // Predicated region
        $region21: #{opt_forward.1} parent=11 // pred_check
          %p535 = pneg %p446
        $region22: #{opt_forward.1} parent=11 // pred_check_branch
          %537 = sbr.rel (%p535) target = $region24
        $region23: #{opt_forward.1} parent=11 // pred_region
          _
        $region24: #{opt_forward.1} parent=11 // pred_fallthru
          _
        // Predicated region
        $region25: #{opt_forward.1} parent=11 // pred_check
          %p538 = pneg %p467
        $region26: #{opt_forward.1} parent=11 // pred_check_branch
          %540 = sbr.rel (%p538) target = $region28
        $region27: #{opt_forward.1} parent=11 // pred_region
          _
        $region28: #{opt_forward.1} parent=11 // pred_fallthru
          _
        // Predicated region
        $region29: #{opt_forward.1} parent=11 // pred_check
          %p541 = pneg %p488
        $region30: #{opt_forward.1} parent=11 // pred_check_branch
          %543 = sbr.rel (%p541) target = $region32
        $region31: #{opt_forward.1} parent=11 // pred_region
          %545 = vsyncadd [#allocation7], 0
          %s546 = sshll.u32 %s17, 4
          %s547 = int_to_ptr.hbm [resolvable:$true] %s546
          %s548 = sshll.u32 [#allocation8], 4
          %s549 = int_to_ptr.vmem [resolvable:$true] %s548
          %554 = dma.hbm_to_vmem [thread:$0]  %s547, 4096, %s549, [#allocation7], 256, 256, 16
        $region32: #{opt_forward.1} parent=11 // pred_fallthru
          _
      $region12: #{opt_forward.1} parent=5 // pred_fallthru
        _
      %p555 = scmp.lt.s32.totalorder %s33, 4
      // Predicated region
      $region33: #{opt_forward.1} parent=5 // pred_check
        %p556 = pneg %p555
      $region34: #{opt_forward.1} parent=5 // pred_check_branch
        %558 = sbr.rel (%p556) target = $region36
      $region35: #{opt_forward.1} parent=5 // pred_region
        // Predicated region
        $region37: #{opt_forward.1} parent=35 // pred_check
          %p559 = pneg %p65
        $region38: #{opt_forward.1} parent=35 // pred_check_branch
          %561 = sbr.rel (%p559) target = $region40
        $region39: #{opt_forward.1} parent=35 // pred_region
          %p562 = scmp.lt.s32.totalorder %s40, 1
          %s563 = scalar_select %p562, %s40, 1
          %s564 = smul.addr %s563, 2
          %s565 = smul.addr %s564, 8
          %s566 = scalar_lea.vmem %s0, %s565
        $region40: #{opt_forward.1} parent=35 // pred_fallthru
          _
        // Predicated region
        $region41: #{opt_forward.1} parent=35 // pred_check
          %p567 = pneg %p133
        $region42: #{opt_forward.1} parent=35 // pred_check_branch
          %569 = sbr.rel (%p567) target = $region44
        $region43: #{opt_forward.1} parent=35 // pred_region
          %p570 = scmp.lt.s32.totalorder %s41, 1
          %s571 = scalar_select %p570, %s41, 1
          %s572 = scalar_lea.vmem %s3, %s571
        $region44: #{opt_forward.1} parent=35 // pred_fallthru
          _
        // Predicated region
        $region45: #{opt_forward.1} parent=35 // pred_check
          %p573 = pneg %p159
        $region46: #{opt_forward.1} parent=35 // pred_check_branch
          %575 = sbr.rel (%p573) target = $region48
        $region47: #{opt_forward.1} parent=35 // pred_region
          %p576 = scmp.lt.s32.totalorder %s41, 1
          %s577 = scalar_select %p576, %s41, 1
          %s578 = scalar_lea.vmem %s4, %s577
        $region48: #{opt_forward.1} parent=35 // pred_fallthru
          _
        // Predicated region
        $region49: #{opt_forward.1} parent=35 // pred_check
          %p579 = pneg %p185
        $region50: #{opt_forward.1} parent=35 // pred_check_branch
          %581 = sbr.rel (%p579) target = $region52
        $region51: #{opt_forward.1} parent=35 // pred_region
          %p582 = scmp.lt.s32.totalorder %s41, 1
          %s583 = scalar_select %p582, %s41, 1
          %s584 = smul.addr %s583, 48
          %s585 = smul.addr %s584, 4
          %s586 = scalar_lea.vmem %s5, %s585
        $region52: #{opt_forward.1} parent=35 // pred_fallthru
          _
        // Predicated region
        $region53: #{opt_forward.1} parent=35 // pred_check
          %p587 = pneg %p211
        $region54: #{opt_forward.1} parent=35 // pred_check_branch
          %589 = sbr.rel (%p587) target = $region56
        $region55: #{opt_forward.1} parent=35 // pred_region
          %p590 = scmp.lt.s32.totalorder %s41, 1
          %s591 = scalar_select %p590, %s41, 1
          %s592 = smul.addr %s591, 3
          %s593 = scalar_lea.vmem %s6, %s592
        $region56: #{opt_forward.1} parent=35 // pred_fallthru
          _
        // Predicated region
        $region57: #{opt_forward.1} parent=35 // pred_check
          %p594 = pneg %p237
        $region58: #{opt_forward.1} parent=35 // pred_check_branch
          %596 = sbr.rel (%p594) target = $region60
        $region59: #{opt_forward.1} parent=35 // pred_region
          %s597 = sand.u32 %s227, 1
          %s598 = scalar_lea.sflag [#allocation4], %s597
          %s599 = sand.u32 %s227, 1
          %s600 = smul.addr %s599, 64
          %s601 = scalar_lea.vmem [#allocation3], %s600
          %603 = vsyncadd %s598, 0
          %s604 = smul.addr %s41, 16
          %s605 = smul.addr %s604, 4
          %s606 = scalar_lea.hbm %s7, %s605
          %s607 = sshll.u32 %s606, 4
          %s608 = int_to_ptr.hbm [resolvable:$true] %s607
          %s609 = sshll.u32 %s601, 4
          %s610 = int_to_ptr.vmem [resolvable:$true] %s609
          %615 = dma.hbm_to_vmem [thread:$0]  %s608, 1024, %s610, %s598, 64, 64, 4
        $region60: #{opt_forward.1} parent=35 // pred_fallthru
          _
        // Predicated region
        $region61: #{opt_forward.1} parent=35 // pred_check
          %p616 = pneg %p263
        $region62: #{opt_forward.1} parent=35 // pred_check_branch
          %618 = sbr.rel (%p616) target = $region64
        $region63: #{opt_forward.1} parent=35 // pred_region
          %p619 = scmp.lt.s32.totalorder %s41, 1
          %s620 = scalar_select %p619, %s41, 1
          %s621 = scalar_lea.vmem %s8, %s620
        $region64: #{opt_forward.1} parent=35 // pred_fallthru
          _
        // Predicated region
        $region65: #{opt_forward.1} parent=35 // pred_check
          %p622 = pneg %p289
        $region66: #{opt_forward.1} parent=35 // pred_check_branch
          %624 = sbr.rel (%p622) target = $region68
        $region67: #{opt_forward.1} parent=35 // pred_region
          %p625 = scmp.lt.s32.totalorder %s41, 1
          %s626 = scalar_select %p625, %s41, 1
          %s627 = scalar_lea.vmem %s9, %s626
        $region68: #{opt_forward.1} parent=35 // pred_fallthru
          _
        // Predicated region
        $region69: #{opt_forward.1} parent=35 // pred_check
          %p628 = pneg %p315
        $region70: #{opt_forward.1} parent=35 // pred_check_branch
          %630 = sbr.rel (%p628) target = $region72
        $region71: #{opt_forward.1} parent=35 // pred_region
          %p631 = scmp.lt.s32.totalorder %s41, 1
          %s632 = scalar_select %p631, %s41, 1
          %s633 = scalar_lea.vmem %s10, %s632
        $region72: #{opt_forward.1} parent=35 // pred_fallthru
          _
        // Predicated region
        $region73: #{opt_forward.1} parent=35 // pred_check
          %p634 = pneg %p341
        $region74: #{opt_forward.1} parent=35 // pred_check_branch
          %636 = sbr.rel (%p634) target = $region76
        $region75: #{opt_forward.1} parent=35 // pred_region
          %p637 = scmp.lt.s32.totalorder %s41, 1
          %s638 = scalar_select %p637, %s41, 1
          %s639 = smul.addr %s638, 32
          %s640 = smul.addr %s639, 4
          %s641 = scalar_lea.vmem %s11, %s640
        $region76: #{opt_forward.1} parent=35 // pred_fallthru
          _
        // Predicated region
        $region77: #{opt_forward.1} parent=35 // pred_check
          %p642 = pneg %p367
        $region78: #{opt_forward.1} parent=35 // pred_check_branch
          %644 = sbr.rel (%p642) target = $region80
        $region79: #{opt_forward.1} parent=35 // pred_region
          %p645 = scmp.lt.s32.totalorder %s41, 1
          %s646 = scalar_select %p645, %s41, 1
          %s647 = smul.addr %s646, 2
          %s648 = scalar_lea.vmem %s12, %s647
        $region80: #{opt_forward.1} parent=35 // pred_fallthru
          _
        // Predicated region
        $region81: #{opt_forward.1} parent=35 // pred_check
          %p649 = pneg %p393
        $region82: #{opt_forward.1} parent=35 // pred_check_branch
          %651 = sbr.rel (%p649) target = $region84
        $region83: #{opt_forward.1} parent=35 // pred_region
          %s652 = sand.u32 %s33, 1
          %s653 = scalar_lea.sflag [#allocation7], %s652
          %s654 = sand.u32 %s383, 1
          %s655 = smul.addr %s654, 128
          %s656 = scalar_lea.vmem [#allocation6], %s655
          %658 = vsyncadd %s653, 0
          %s659 = smul.addr %s41, 32
          %s660 = smul.addr %s659, 4
          %s661 = scalar_lea.hbm %s13, %s660
          %s662 = sshll.u32 %s661, 4
          %s663 = int_to_ptr.hbm [resolvable:$true] %s662
          %s664 = sshll.u32 %s656, 4
          %s665 = int_to_ptr.vmem [resolvable:$true] %s664
          %670 = dma.hbm_to_vmem [thread:$0]  %s663, 2048, %s665, %s653, 64, 64, 4
        $region84: #{opt_forward.1} parent=35 // pred_fallthru
          _
        // Predicated region
        $region85: #{opt_forward.1} parent=35 // pred_check
          %p671 = pneg %p419
        $region86: #{opt_forward.1} parent=35 // pred_check_branch
          %673 = sbr.rel (%p671) target = $region88
        $region87: #{opt_forward.1} parent=35 // pred_region
          %p674 = scmp.lt.s32.totalorder %s41, 1
          %s675 = scalar_select %p674, %s41, 1
          %s676 = scalar_lea.vmem %s14, %s675
        $region88: #{opt_forward.1} parent=35 // pred_fallthru
          _
      $region36: #{opt_forward.1} parent=5 // pred_fallthru
        _
      %p677 = scmp.le.s32.totalorder 1, %s33
      %p678 = scmp.lt.s32.totalorder %s33, 5
      %p679 = pnand %p677, %p678
      %p680 = pneg %p679
      // Predicated region
      $region89: #{opt_forward.1} parent=5 // pred_check
        _
      $region90: #{opt_forward.1} parent=5 // pred_check_branch
        %682 = sbr.rel (%p679) target = $region92
      $region91: #{opt_forward.1} parent=5 // pred_region
        %s683 = ssub.s32 %s33, 1
        %s684 = sand.u32 %s230, 1
        %s685 = scalar_lea.sflag [#allocation4], %s684
        %s686 = sand.u32 %s230, 1
        %s687 = smul.addr %s686, 64
        %s688 = scalar_lea.vmem [#allocation3], %s687
        // Predicated region
        $region93: #{opt_forward.1} parent=91 // pred_check
          %p689 = pneg %p243
        $region94: #{opt_forward.1} parent=91 // pred_check_branch
          %691 = sbr.rel (%p689) target = $region96
        $region95: #{opt_forward.1} parent=91 // pred_region
          %693 = dma.done %s685, 1024
        $region96: #{opt_forward.1} parent=91 // pred_fallthru
          _
        %s694 = sand.u32 %s38, 1
        %s695 = scalar_lea.sflag [#allocation7], %s694
        %s696 = sand.u32 %s386, 1
        %s697 = smul.addr %s696, 128
        %s698 = scalar_lea.vmem [#allocation6], %s697
        // Predicated region
        $region97: #{opt_forward.1} parent=91 // pred_check
          %p699 = pneg %p399
        $region98: #{opt_forward.1} parent=91 // pred_check_branch
          %701 = sbr.rel (%p699) target = $region100
        $region99: #{opt_forward.1} parent=91 // pred_region
          %703 = dma.done %s695, 2048
        $region100: #{opt_forward.1} parent=91 // pred_fallthru
          _
        // Predicated region
        $region101: #{opt_forward.1} parent=91 // pred_check
          %p704 = pneg %p488
        $region102: #{opt_forward.1} parent=91 // pred_check_branch
          %706 = sbr.rel (%p704) target = $region104
        $region103: #{opt_forward.1} parent=91 // pred_region
          %708 = dma.done [#allocation7], 4096
        $region104: #{opt_forward.1} parent=91 // pred_fallthru
          _
        %p709 = scmp.lt.s32.totalorder %s42, 1
        %s710 = scalar_select %p709, %s42, 1
        %s711 = smul.addr %s710, 2
        %s712 = smul.addr %s711, 8
        %s713 = scalar_lea.vmem %s0, %s712
        %p714 = pneg %p71
        %p715 = pneg %p68
        %p716 = pneg %p92
        %p717 = pneg %p89
        %p718 = pneg %p113
        %p719 = pneg %p110
        %p720 = scmp.lt.s32.totalorder %s43, 1
        %s721 = scalar_select %p720, %s43, 1
        %s722 = scalar_lea.vmem %s3, %s721
        %p723 = pneg %p139
        %p724 = pneg %p136
        %p725 = scmp.lt.s32.totalorder %s43, 1
        %s726 = scalar_select %p725, %s43, 1
        %s727 = scalar_lea.vmem %s4, %s726
        %p728 = pneg %p165
        %p729 = pneg %p162
        %p730 = scmp.lt.s32.totalorder %s43, 1
        %s731 = scalar_select %p730, %s43, 1
        %s732 = smul.addr %s731, 48
        %s733 = smul.addr %s732, 4
        %s734 = scalar_lea.vmem %s5, %s733
        %p735 = pneg %p191
        %p736 = pneg %p188
        %p737 = scmp.lt.s32.totalorder %s43, 1
        %s738 = scalar_select %p737, %s43, 1
        %s739 = smul.addr %s738, 3
        %s740 = scalar_lea.vmem %s6, %s739
        %p741 = pneg %p217
        %p742 = pneg %p214
        %s743 = sand.u32 %s230, 1
        %s744 = scalar_lea.sflag [#allocation4], %s743
        %s745 = sand.u32 %s230, 1
        %s746 = smul.addr %s745, 64
        %s747 = scalar_lea.vmem [#allocation3], %s746
        %p748 = pneg %p243
        %p749 = pneg %p240
        %p750 = scmp.lt.s32.totalorder %s43, 1
        %s751 = scalar_select %p750, %s43, 1
        %s752 = scalar_lea.vmem %s8, %s751
        %p753 = pneg %p269
        %p754 = pneg %p266
        %p755 = scmp.lt.s32.totalorder %s43, 1
        %s756 = scalar_select %p755, %s43, 1
        %s757 = scalar_lea.vmem %s9, %s756
        %p758 = pneg %p295
        %p759 = pneg %p292
        %p760 = scmp.lt.s32.totalorder %s43, 1
        %s761 = scalar_select %p760, %s43, 1
        %s762 = scalar_lea.vmem %s10, %s761
        %p763 = pneg %p321
        %p764 = pneg %p318
        %p765 = scmp.lt.s32.totalorder %s43, 1
        %s766 = scalar_select %p765, %s43, 1
        %s767 = smul.addr %s766, 32
        %s768 = smul.addr %s767, 4
        %s769 = scalar_lea.vmem %s11, %s768
        %p770 = pneg %p347
        %p771 = pneg %p344
        %p772 = scmp.lt.s32.totalorder %s43, 1
        %s773 = scalar_select %p772, %s43, 1
        %s774 = smul.addr %s773, 2
        %s775 = scalar_lea.vmem %s12, %s774
        %p776 = pneg %p373
        %p777 = pneg %p370
        %s778 = sand.u32 %s38, 1
        %s779 = scalar_lea.sflag [#allocation7], %s778
        %s780 = sand.u32 %s386, 1
        %s781 = smul.addr %s780, 128
        %s782 = scalar_lea.vmem [#allocation6], %s781
        %p783 = pneg %p399
        %p784 = pneg %p396
        %p785 = scmp.lt.s32.totalorder %s43, 1
        %s786 = scalar_select %p785, %s43, 1
        %s787 = scalar_lea.vmem %s14, %s786
        %p788 = pneg %p425
        %p789 = pneg %p422
        %p790 = pneg %p446
        %p791 = pneg %p443
        %p792 = pneg %p467
        %p793 = pneg %p464
        %p794 = pneg %p488
        %p795 = pneg %p485
        %p796 = pneg %p514
        %p797 = pneg %p511
        %s798 = sand.u32 %s501, 1
        %s799 = scalar_lea.sflag [#allocation5], %s798
        %s800 = sand.u32 %s501, 1
        %s801 = smul.addr %s800, 64
        %s802 = scalar_lea.vmem [#allocation9], %s801
        %p803 = scmp.lt.s32.totalorder %s42, 1
        %s804 = scalar_select %p803, %s42, 1
        %s805 = smul.addr %s804, 2
        %s806 = smul.addr %s805, 8
        %s807 = scalar_lea.vmem %s0, %s806
        %p808 = scmp.lt.s32.totalorder %s43, 1
        %s809 = scalar_select %p808, %s43, 1
        %s810 = scalar_lea.vmem %s3, %s809
        %p811 = scmp.lt.s32.totalorder %s43, 1
        %s812 = scalar_select %p811, %s43, 1
        %s813 = scalar_lea.vmem %s4, %s812
        %p814 = scmp.lt.s32.totalorder %s43, 1
        %s815 = scalar_select %p814, %s43, 1
        %s816 = smul.addr %s815, 48
        %s817 = smul.addr %s816, 4
        %s818 = scalar_lea.vmem %s5, %s817
        %p819 = scmp.lt.s32.totalorder %s43, 1
        %s820 = scalar_select %p819, %s43, 1
        %s821 = smul.addr %s820, 3
        %s822 = scalar_lea.vmem %s6, %s821
        %p823 = scmp.lt.s32.totalorder %s43, 1
        %s824 = scalar_select %p823, %s43, 1
        %s825 = scalar_lea.vmem %s8, %s824
        %p826 = scmp.lt.s32.totalorder %s43, 1
        %s827 = scalar_select %p826, %s43, 1
        %s828 = scalar_lea.vmem %s9, %s827
        %p829 = scmp.lt.s32.totalorder %s43, 1
        %s830 = scalar_select %p829, %s43, 1
        %s831 = scalar_lea.vmem %s10, %s830
        %p832 = scmp.lt.s32.totalorder %s43, 1
        %s833 = scalar_select %p832, %s43, 1
        %s834 = smul.addr %s833, 32
        %s835 = smul.addr %s834, 4
        %s836 = scalar_lea.vmem %s11, %s835
        %p837 = scmp.lt.s32.totalorder %s43, 1
        %s838 = scalar_select %p837, %s43, 1
        %s839 = smul.addr %s838, 2
        %s840 = scalar_lea.vmem %s12, %s839
        %p841 = scmp.lt.s32.totalorder %s43, 1
        %s842 = scalar_select %p841, %s43, 1
        %s843 = scalar_lea.vmem %s14, %s842
        %p845 = scmp.eq.s32.totalorder %s43, 0
        // Predicated region
        $region105: #{opt_forward.1} parent=91 // pred_check
          %p846 = pneg %p845
        $region106: #{opt_forward.1} parent=91 // pred_check_branch
          %848 = sbr.rel (%p846) target = $region108
        $region107: #{opt_forward.1} parent=91 // pred_region
          %v849 = vld [vmem:[%s807] sm:$0xff]
          %v850 = vld [vmem:[%s807 + $0x8] sm:$0xff]
          %851 = vst [vmem:[#allocation2] sm:$0xff] %v849
          %852 = vst [vmem:[#allocation2 + $0x8] sm:$0xff] %v850
        $region108: #{opt_forward.1} parent=91 // pred_fallthru
          _
        %v853 = vld [vmem:[#allocation2] sm:$0xff]
        %v854 = vld [vmem:[#allocation2 + $0x8] sm:$0xff]
        %v855 = vld [vmem:[%s810] sm:$0x1]
        %v856 = vld [vmem:[%s813] sm:$0x1]
        %857 = vadd.xlane.f32.xlu0 %v853
        %v858 = vpop.xlane.xlu0 %857
        %859 = vadd.xlane.f32.xlu0 %v854
        %v860 = vpop.xlane.xlu0 %859
        %v861 = vrcp.pop 128.0
        %v862 = vmul.f32 128.0, %v861
        %v863 = vsub.f32 1.0, %v862
        %v864 = vmul.f32 %v861, %v863
        %v865 = vadd.f32 %v861, %v864
        %vm866 = vweird.f32 %v861
        %v867 = vsel %vm866, %v861, %v865
        %v868 = vmul.f32 %v858, %v867
        %v869 = vmul.f32 %v860, %v867
        %v870 = vsub.f32 %v853, %v868
        %v871 = vsub.f32 %v854, %v869
        %v872 = vmul.f32 %v870, %v870
        %v873 = vmul.f32 %v871, %v871
        %874 = vadd.xlane.f32.xlu0 %v872
        %v875 = vpop.xlane.xlu0 %874
        %876 = vadd.xlane.f32.xlu0 %v873
        %v877 = vpop.xlane.xlu0 %876
        %v878 = vmul.f32 %v875, %v867
        %v879 = vmul.f32 %v877, %v867
        %v880 = vadd.f32 %v878, 1e-05
        %v881 = vadd.f32 %v879, 1e-05
        %v882 = vrsqrt.pop %v880
        %v883 = vmul.f32 %v882, %v880
        %v884 = vmul.f32 %v883, %v882
        %v885 = vmul.f32 0.5, %v884
        %v886 = vsub.f32 1.5, %v885
        %v887 = vmul.f32 %v882, %v886
        %vm888 = vweird.f32 %v880
        %vm889 = vweird.f32 %v882
        %vm890 = vmor %vm888, %vm889
        %v891 = vsel %vm890, %v882, %v887
        %v892 = vrsqrt.pop %v881
        %v893 = vmul.f32 %v892, %v881
        %v894 = vmul.f32 %v893, %v892
        %v895 = vmul.f32 0.5, %v894
        %v896 = vsub.f32 1.5, %v895
        %v897 = vmul.f32 %v892, %v896
        %vm898 = vweird.f32 %v881
        %vm899 = vweird.f32 %v892
        %vm900 = vmor %vm898, %vm899
        %v901 = vsel %vm900, %v892, %v897
        %v902 = vmul.f32 %v870, %v891
        %v903 = vmul.f32 %v871, %v901
        %v905 = vperm.slane %v855, 0
        %v907 = vmul.f32 %v902, %v905
        %v908 = vmul.f32 %v903, %v905
        %v910 = vperm.slane %v856, 0
        %v912 = vadd.f32 %v907, %v910
        %v913 = vadd.f32 %v908, %v910
        %v914 = vpack.c.bf16 %v913, %v912
        %v915 = vld [vmem:[%s818] sm:$0xff]
        %v916 = vld [vmem:[%s818 + $0x8] sm:$0xf]
        %v917 = vld [vmem:[%s818 + $0xc] sm:$0xff]
        %v918 = vld [vmem:[%s818 + $0x14] sm:$0xf]
        %v919 = vld [vmem:[%s818 + $0x18] sm:$0xff]
        %v920 = vld [vmem:[%s818 + $0x20] sm:$0xf]
        %v921 = vld [vmem:[%s818 + $0x24] sm:$0xff]
        %v922 = vld [vmem:[%s818 + $0x2c] sm:$0xf]
        %v923 = vld [vmem:[%s818 + $0x30] sm:$0xff]
        %v924 = vld [vmem:[%s818 + $0x38] sm:$0xf]
        %v925 = vld [vmem:[%s818 + $0x3c] sm:$0xff]
        %v926 = vld [vmem:[%s818 + $0x44] sm:$0xf]
        %v927 = vld [vmem:[%s818 + $0x48] sm:$0xff]
        %v928 = vld [vmem:[%s818 + $0x50] sm:$0xf]
        %v929 = vld [vmem:[%s818 + $0x54] sm:$0xff]
        %v930 = vld [vmem:[%s818 + $0x5c] sm:$0xf]
        %v931 = vld [vmem:[%s818 + $0x60] sm:$0xff]
        %v932 = vld [vmem:[%s818 + $0x68] sm:$0xf]
        %v933 = vld [vmem:[%s818 + $0x6c] sm:$0xff]
        %v934 = vld [vmem:[%s818 + $0x74] sm:$0xf]
        %v935 = vld [vmem:[%s818 + $0x78] sm:$0xff]
        %v936 = vld [vmem:[%s818 + $0x80] sm:$0xf]
        %v937 = vld [vmem:[%s818 + $0x84] sm:$0xff]
        %v938 = vld [vmem:[%s818 + $0x8c] sm:$0xf]
        %v939 = vld [vmem:[%s818 + $0x90] sm:$0xff]
        %v940 = vld [vmem:[%s818 + $0x98] sm:$0xf]
        %v941 = vld [vmem:[%s818 + $0x9c] sm:$0xff]
        %v942 = vld [vmem:[%s818 + $0xa4] sm:$0xf]
        %v943 = vld [vmem:[%s818 + $0xa8] sm:$0xff]
        %v944 = vld [vmem:[%s818 + $0xb0] sm:$0xf]
        %v945 = vld [vmem:[%s818 + $0xb4] sm:$0xff]
        %v946 = vld [vmem:[%s818 + $0xbc] sm:$0xf]
        %v947 = vld [vmem:[%s822] sm:$0x7]
        %v949 = vperm.slane %v947, 0
        %v950 = vperm.slane %v947, 1
        %v951 = vperm.slane %v947, 2
        %v987 = vunpack.c.l.b16 %v915
        %v988 = vunpack.c.h.b16 %v915
        %v989 = vunpack.c.l.b16 %v916
        %v990 = vunpack.c.l.b16 %v917
        %v991 = vunpack.c.h.b16 %v917
        %v992 = vunpack.c.l.b16 %v918
        %v993 = vunpack.c.l.b16 %v919
        %v994 = vunpack.c.h.b16 %v919
        %v995 = vunpack.c.l.b16 %v920
        %v996 = vunpack.c.l.b16 %v921
        %v997 = vunpack.c.h.b16 %v921
        %v998 = vunpack.c.l.b16 %v922
        %v999 = vunpack.c.l.b16 %v923
        %v1000 = vunpack.c.h.b16 %v923
        %v1001 = vunpack.c.l.b16 %v924
        %v1002 = vunpack.c.l.b16 %v925
        %v1003 = vunpack.c.h.b16 %v925
        %v1004 = vunpack.c.l.b16 %v926
        %v1005 = vunpack.c.l.b16 %v927
        %v1006 = vunpack.c.h.b16 %v927
        %v1007 = vunpack.c.l.b16 %v928
        %v1008 = vunpack.c.l.b16 %v929
        %v1009 = vunpack.c.h.b16 %v929
        %v1010 = vunpack.c.l.b16 %v930
        %v1011 = vunpack.c.l.b16 %v931
        %v1012 = vunpack.c.h.b16 %v931
        %v1013 = vunpack.c.l.b16 %v932
        %v1014 = vunpack.c.l.b16 %v933
        %v1015 = vunpack.c.h.b16 %v933
        %v1016 = vunpack.c.l.b16 %v934
        %v1017 = vunpack.c.l.b16 %v935
        %v1018 = vunpack.c.h.b16 %v935
        %v1019 = vunpack.c.l.b16 %v936
        %v1020 = vunpack.c.l.b16 %v937
        %v1021 = vunpack.c.h.b16 %v937
        %v1022 = vunpack.c.l.b16 %v938
        %v1023 = vunpack.c.l.b16 %v939
        %v1024 = vunpack.c.h.b16 %v939
        %v1025 = vunpack.c.l.b16 %v940
        %v1026 = vunpack.c.l.b16 %v941
        %v1027 = vunpack.c.h.b16 %v941
        %v1028 = vunpack.c.l.b16 %v942
        %v1029 = vunpack.c.l.b16 %v943
        %v1030 = vunpack.c.h.b16 %v943
        %v1031 = vunpack.c.l.b16 %v944
        %v1032 = vunpack.c.l.b16 %v945
        %v1033 = vunpack.c.h.b16 %v945
        %v1034 = vunpack.c.l.b16 %v946
        %v1035 = vpack.c.b16 %v990, %v987
        %v1036 = vpack.c.b16 %v991, %v988
        %v1037 = vpack.c.b16 %v992, %v989
        %v1038 = vpack.c.b16 %v996, %v993
        %v1039 = vpack.c.b16 %v997, %v994
        %v1040 = vpack.c.b16 %v998, %v995
        %v1041 = vpack.c.b16 %v1002, %v999
        %v1042 = vpack.c.b16 %v1003, %v1000
        %v1043 = vpack.c.b16 %v1004, %v1001
        %v1044 = vpack.c.b16 %v1008, %v1005
        %v1045 = vpack.c.b16 %v1009, %v1006
        %v1046 = vpack.c.b16 %v1010, %v1007
        %v1047 = vpack.c.b16 %v1014, %v1011
        %v1048 = vpack.c.b16 %v1015, %v1012
        %v1049 = vpack.c.b16 %v1016, %v1013
        %v1050 = vpack.c.b16 %v1020, %v1017
        %v1051 = vpack.c.b16 %v1021, %v1018
        %v1052 = vpack.c.b16 %v1022, %v1019
        %v1053 = vpack.c.b16 %v1026, %v1023
        %v1054 = vpack.c.b16 %v1027, %v1024
        %v1055 = vpack.c.b16 %v1028, %v1025
        %v1056 = vpack.c.b16 %v1032, %v1029
        %v1057 = vpack.c.b16 %v1033, %v1030
        %v1058 = vpack.c.b16 %v1034, %v1031
        %1083 = vmatpush.bf16.msra.mxu0 %v1056
        %1084 = vmatpush.bf16.msra.mxu0 %v1053
        %1085 = vmatpush.bf16.msra.mxu0 %v1050
        %1086 = vmatpush.bf16.msra.mxu0 %v1047
        %1087 = vmatpush.bf16.msra.mxu0 %v1044
        %1088 = vmatpush.bf16.msra.mxu0 %v1041
        %1089 = vmatpush.bf16.msra.mxu0 %v1038
        %1090 = vmatpush.bf16.msra.mxu0 %v1035
        %1091 = vmatmul.bf16.gmra.mxu0 %v914
        %v1092 = vpop.f32.mrf.mxu0
        %v1093 = vadd.f32 %v949, %v1092
        %v1094 = vpop.f32.mrf.mxu0
        %v1095 = vadd.f32 %v949, %v1094
        %1096 = vdwg.mxu0
        %1097 = vmatpush.bf16.msra.mxu0 %v1057
        %1098 = vmatpush.bf16.msra.mxu0 %v1054
        %1099 = vmatpush.bf16.msra.mxu0 %v1051
        %1100 = vmatpush.bf16.msra.mxu0 %v1048
        %1101 = vmatpush.bf16.msra.mxu0 %v1045
        %1102 = vmatpush.bf16.msra.mxu0 %v1042
        %1103 = vmatpush.bf16.msra.mxu0 %v1039
        %1104 = vmatpush.bf16.msra.mxu0 %v1036
        %1105 = vmatmul.bf16.gmra.mxu0 %v914
        %v1106 = vpop.f32.mrf.mxu0
        %v1107 = vadd.f32 %v950, %v1106
        %v1108 = vpop.f32.mrf.mxu0
        %v1109 = vadd.f32 %v950, %v1108
        %1110 = vdwg.mxu0
        %1111 = vmatpush.bf16.msra.mxu0 %v1058
        %1112 = vmatpush.bf16.msra.mxu0 %v1055
        %1113 = vmatpush.bf16.msra.mxu0 %v1052
        %1114 = vmatpush.bf16.msra.mxu0 %v1049
        %1115 = vmatpush.bf16.msra.mxu0 %v1046
        %1116 = vmatpush.bf16.msra.mxu0 %v1043
        %1117 = vmatpush.bf16.msra.mxu0 %v1040
        %1118 = vmatpush.bf16.msra.mxu0 %v1037
        %1119 = vmatmul.bf16.gmra.mxu0 %v914
        %v1120 = vpop.f32.mrf.mxu0
        %v1121 = vadd.f32 %v951, %v1120
        %v1122 = vpop.f32.mrf.mxu0
        %v1123 = vadd.f32 %v951, %v1122
        %1124 = vdwg.mxu0
        %v1125 = vpack.c.bf16 %v1109, %v1107
        %v1126 = vpack.c.bf16 %v1123, %v1121
        %v1127 = vld [vmem:[%s2] sm:$0x1]
        %v1128 = vld [vmem:[%s2 + $0x1] sm:$0x1]
        %v1129 = vld [vmem:[%s2 + $0x2] sm:$0x1]
        %v1130 = vld [vmem:[%s2 + $0x3] sm:$0x1]
        %v1135 = vperm.slane %v1127, 0
        %v1136 = vperm.slane %v1128, 0
        %v1137 = vperm.slane %v1129, 0
        %v1138 = vperm.slane %v1130, 0
        %v1143 = vmul.f32 %v1093, %v1135
        %v1144 = vmul.f32 %v1095, %v1135
        %v1145 = vmul.f32 %v1093, %v1136
        %v1146 = vmul.f32 %v1095, %v1136
        %v1147 = vmul.f32 %v1093, %v1137
        %v1148 = vmul.f32 %v1095, %v1137
        %v1149 = vmul.f32 %v1093, %v1138
        %v1150 = vmul.f32 %v1095, %v1138
        %v1151 = vpack.c.bf16 %v1144, %v1143
        %v1152 = vpack.c.bf16 %v1146, %v1145
        %v1153 = vpack.c.bf16 %v1148, %v1147
        %v1154 = vpack.c.bf16 %v1150, %v1149
        %v1155 = vld [vmem:[%s1] sm:$0xff]
        %v1156 = vld [vmem:[%s1 + $0x8] sm:$0xff]
        %v1157 = vld [vmem:[%s1 + $0x10] sm:$0xff]
        %v1158 = vld [vmem:[%s1 + $0x18] sm:$0xff]
        %v1159 = vld [vmem:[%s1 + $0x20] sm:$0xff]
        %v1160 = vld [vmem:[%s1 + $0x28] sm:$0xff]
        %v1161 = vld [vmem:[%s1 + $0x30] sm:$0xff]
        %v1162 = vld [vmem:[%s1 + $0x38] sm:$0xff]
        %1163 = vmatpush.bf16.xpose.msra.mxu0 0
        %1164 = vmatpush.bf16.xpose.msra.mxu0 0
        %1165 = vmatpush.bf16.xpose.msra.mxu0 0
        %1166 = vmatpush.bf16.xpose.msra.mxu0 0
        %1167 = vmatpush.bf16.xpose.msra.mxu0 0
        %1168 = vmatpush.bf16.xpose.msra.mxu0 0
        %1169 = vmatpush.bf16.xpose.msra.mxu0 0
        %1170 = vmatpush.bf16.xpose.msra.mxu0 %v1125
        %1171 = vmatmul.bf16.gmra.mxu0 %v1151
        %v1172 = vpop.f32.mrf.mxu0
        %v1173 = vadd.f32 %v1155, %v1172
        %v1174 = vpop.f32.mrf.mxu0
        %v1175 = vadd.f32 %v1156, %v1174
        %1176 = vmatmul.bf16.gmra.mxu0 %v1152
        %v1177 = vpop.f32.mrf.mxu0
        %v1178 = vadd.f32 %v1157, %v1177
        %v1179 = vpop.f32.mrf.mxu0
        %v1180 = vadd.f32 %v1158, %v1179
        %1181 = vmatmul.bf16.gmra.mxu0 %v1153
        %v1182 = vpop.f32.mrf.mxu0
        %v1183 = vadd.f32 %v1159, %v1182
        %v1184 = vpop.f32.mrf.mxu0
        %v1185 = vadd.f32 %v1160, %v1184
        %1186 = vmatmul.bf16.gmra.mxu0 %v1154
        %v1187 = vpop.f32.mrf.mxu0
        %v1188 = vadd.f32 %v1161, %v1187
        %v1189 = vpop.f32.mrf.mxu0
        %v1190 = vadd.f32 %v1162, %v1189
        %1191 = vdwg.mxu0
        %vm1192 = vcmask 130048
        %v1193 = vsel %vm1192, %v1173, -inf
        %1194 = vmax.xlane.f32.xlu0 %v1193
        %v1195 = vpop.xlane.xlu0 %1194
        %v1196 = vsel %vm1192, %v1175, -inf
        %1197 = vmax.xlane.f32.xlu0 %v1196
        %v1198 = vpop.xlane.xlu0 %1197
        %v1199 = vsel %vm1192, %v1178, -inf
        %1200 = vmax.xlane.f32.xlu0 %v1199
        %v1201 = vpop.xlane.xlu0 %1200
        %v1202 = vsel %vm1192, %v1180, -inf
        %1203 = vmax.xlane.f32.xlu0 %v1202
        %v1204 = vpop.xlane.xlu0 %1203
        %v1205 = vsel %vm1192, %v1183, -inf
        %1206 = vmax.xlane.f32.xlu0 %v1205
        %v1207 = vpop.xlane.xlu0 %1206
        %v1208 = vsel %vm1192, %v1185, -inf
        %1209 = vmax.xlane.f32.xlu0 %v1208
        %v1210 = vpop.xlane.xlu0 %1209
        %v1211 = vsel %vm1192, %v1188, -inf
        %1212 = vmax.xlane.f32.xlu0 %v1211
        %v1213 = vpop.xlane.xlu0 %1212
        %v1214 = vsel %vm1192, %v1190, -inf
        %1215 = vmax.xlane.f32.xlu0 %v1214
        %v1216 = vpop.xlane.xlu0 %1215
        %v1217 = vsub.f32 %v1173, %v1195
        %v1218 = vsub.f32 %v1175, %v1198
        %v1219 = vsub.f32 %v1178, %v1201
        %v1220 = vsub.f32 %v1180, %v1204
        %v1221 = vsub.f32 %v1183, %v1207
        %v1222 = vsub.f32 %v1185, %v1210
        %v1223 = vsub.f32 %v1188, %v1213
        %v1224 = vsub.f32 %v1190, %v1216
        %v1225 = vmul.f32 %v1217, 1.442695
        %v1226 = vpow.pop %v1225
        %v1227 = vmul.f32 %v1218, 1.442695
        %v1228 = vpow.pop %v1227
        %v1229 = vmul.f32 %v1219, 1.442695
        %v1230 = vpow.pop %v1229
        %v1231 = vmul.f32 %v1220, 1.442695
        %v1232 = vpow.pop %v1231
        %v1233 = vmul.f32 %v1221, 1.442695
        %v1234 = vpow.pop %v1233
        %v1235 = vmul.f32 %v1222, 1.442695
        %v1236 = vpow.pop %v1235
        %v1237 = vmul.f32 %v1223, 1.442695
        %v1238 = vpow.pop %v1237
        %v1239 = vmul.f32 %v1224, 1.442695
        %v1240 = vpow.pop %v1239
        %v1241 = vsel %vm1192, %v1226, 0.0
        %1242 = vadd.xlane.f32.xlu0 %v1241
        %v1243 = vpop.xlane.xlu0 %1242
        %v1244 = vsel %vm1192, %v1228, 0.0
        %1245 = vadd.xlane.f32.xlu0 %v1244
        %v1246 = vpop.xlane.xlu0 %1245
        %v1247 = vsel %vm1192, %v1230, 0.0
        %1248 = vadd.xlane.f32.xlu0 %v1247
        %v1249 = vpop.xlane.xlu0 %1248
        %v1250 = vsel %vm1192, %v1232, 0.0
        %1251 = vadd.xlane.f32.xlu0 %v1250
        %v1252 = vpop.xlane.xlu0 %1251
        %v1253 = vsel %vm1192, %v1234, 0.0
        %1254 = vadd.xlane.f32.xlu0 %v1253
        %v1255 = vpop.xlane.xlu0 %1254
        %v1256 = vsel %vm1192, %v1236, 0.0
        %1257 = vadd.xlane.f32.xlu0 %v1256
        %v1258 = vpop.xlane.xlu0 %1257
        %v1259 = vsel %vm1192, %v1238, 0.0
        %1260 = vadd.xlane.f32.xlu0 %v1259
        %v1261 = vpop.xlane.xlu0 %1260
        %v1262 = vsel %vm1192, %v1240, 0.0
        %1263 = vadd.xlane.f32.xlu0 %v1262
        %v1264 = vpop.xlane.xlu0 %1263
        %v1265 = vrcp.pop %v1243
        %v1266 = vrcp.pop %v1246
        %v1267 = vrcp.pop %v1249
        %v1268 = vrcp.pop %v1252
        %v1269 = vrcp.pop %v1255
        %v1270 = vrcp.pop %v1258
        %v1271 = vrcp.pop %v1261
        %v1272 = vrcp.pop %v1264
        %v1273 = vmul.f32 %v1226, %v1265
        %v1274 = vmul.f32 %v1228, %v1266
        %v1275 = vmul.f32 %v1230, %v1267
        %v1276 = vmul.f32 %v1232, %v1268
        %v1277 = vmul.f32 %v1234, %v1269
        %v1278 = vmul.f32 %v1236, %v1270
        %v1279 = vmul.f32 %v1238, %v1271
        %v1280 = vmul.f32 %v1240, %v1272
        %v1281 = vpack.c.bf16 %v1274, %v1273
        %v1282 = vpack.c.bf16 %v1276, %v1275
        %v1283 = vpack.c.bf16 %v1278, %v1277
        %v1284 = vpack.c.bf16 %v1280, %v1279
        %v1286 = vsel %vm1192, %v1281, 0
        %v1289 = vsel %vm1192, %v1282, 0
        %v1292 = vsel %vm1192, %v1283, 0
        %v1295 = vsel %vm1192, %v1284, 0
        %1297 = vmatpush.bf16.msra.mxu0 0
        %1298 = vmatpush.bf16.msra.mxu0 0
        %1299 = vmatpush.bf16.msra.mxu0 0
        %1300 = vmatpush.bf16.msra.mxu0 0
        %1301 = vmatpush.bf16.msra.mxu0 0
        %1302 = vmatpush.bf16.msra.mxu0 0
        %1303 = vmatpush.bf16.msra.mxu0 0
        %1304 = vmatpush.bf16.msra.mxu0 %v1126
        %1305 = vmatmul.bf16.gmra.mxu0 %v1286
        %v1306 = vpop.f32.mrf.mxu0
        %v1307 = vadd.f32 0.0, %v1306
        %v1308 = vpop.f32.mrf.mxu0
        %v1309 = vadd.f32 0.0, %v1308
        %1310 = vmatmul.bf16.gmra.mxu0 %v1289
        %v1311 = vpop.f32.mrf.mxu0
        %v1312 = vadd.f32 0.0, %v1311
        %v1313 = vpop.f32.mrf.mxu0
        %v1314 = vadd.f32 0.0, %v1313
        %1315 = vmatmul.bf16.gmra.mxu0 %v1292
        %v1316 = vpop.f32.mrf.mxu0
        %v1317 = vadd.f32 0.0, %v1316
        %v1318 = vpop.f32.mrf.mxu0
        %v1319 = vadd.f32 0.0, %v1318
        %1320 = vmatmul.bf16.gmra.mxu0 %v1295
        %v1321 = vpop.f32.mrf.mxu0
        %v1322 = vadd.f32 0.0, %v1321
        %v1323 = vpop.f32.mrf.mxu0
        %v1324 = vadd.f32 0.0, %v1323
        %1325 = vdwg.mxu0
        %v1326 = vmul.f32 %v1307, %v1135
        %v1327 = vmul.f32 %v1309, %v1135
        %v1328 = vmul.f32 %v1312, %v1136
        %v1329 = vmul.f32 %v1314, %v1136
        %v1330 = vmul.f32 %v1317, %v1137
        %v1331 = vmul.f32 %v1319, %v1137
        %v1332 = vmul.f32 %v1322, %v1138
        %v1333 = vmul.f32 %v1324, %v1138
        %v1334 = vadd.f32 %v1326, %v1328
        %v1335 = vadd.f32 %v1334, %v1330
        %v1336 = vadd.f32 %v1335, %v1332
        %v1337 = vadd.f32 %v1327, %v1329
        %v1338 = vadd.f32 %v1337, %v1331
        %v1339 = vadd.f32 %v1338, %v1333
        %v1340 = vpack.c.bf16 %v1339, %v1336
        %v1341 = vld [vmem:[%s688] sm:$0xf]
        %v1342 = vld [vmem:[%s688 + $0x4] sm:$0xf]
        %v1343 = vld [vmem:[%s688 + $0x8] sm:$0xf]
        %v1344 = vld [vmem:[%s688 + $0xc] sm:$0xf]
        %v1345 = vld [vmem:[%s688 + $0x10] sm:$0xf]
        %v1346 = vld [vmem:[%s688 + $0x14] sm:$0xf]
        %v1347 = vld [vmem:[%s688 + $0x18] sm:$0xf]
        %v1348 = vld [vmem:[%s688 + $0x1c] sm:$0xf]
        %v1349 = vld [vmem:[%s688 + $0x20] sm:$0xf]
        %v1350 = vld [vmem:[%s688 + $0x24] sm:$0xf]
        %v1351 = vld [vmem:[%s688 + $0x28] sm:$0xf]
        %v1352 = vld [vmem:[%s688 + $0x2c] sm:$0xf]
        %v1353 = vld [vmem:[%s688 + $0x30] sm:$0xf]
        %v1354 = vld [vmem:[%s688 + $0x34] sm:$0xf]
        %v1355 = vld [vmem:[%s688 + $0x38] sm:$0xf]
        %v1356 = vld [vmem:[%s688 + $0x3c] sm:$0xf]
        %v1357 = vld [vmem:[%s825] sm:$0x1]
        %v1359 = vperm.slane %v1357, 0
        %v1377 = vunpack.c.l.b16 %v1341
        %v1378 = vunpack.c.l.b16 %v1342
        %v1379 = vunpack.c.l.b16 %v1343
        %v1380 = vunpack.c.l.b16 %v1344
        %v1381 = vunpack.c.l.b16 %v1345
        %v1382 = vunpack.c.l.b16 %v1346
        %v1383 = vunpack.c.l.b16 %v1347
        %v1384 = vunpack.c.l.b16 %v1348
        %v1385 = vunpack.c.l.b16 %v1349
        %v1386 = vunpack.c.l.b16 %v1350
        %v1387 = vunpack.c.l.b16 %v1351
        %v1388 = vunpack.c.l.b16 %v1352
        %v1389 = vunpack.c.l.b16 %v1353
        %v1390 = vunpack.c.l.b16 %v1354
        %v1391 = vunpack.c.l.b16 %v1355
        %v1392 = vunpack.c.l.b16 %v1356
        %v1393 = vpack.c.b16 %v1378, %v1377
        %v1394 = vpack.c.b16 %v1380, %v1379
        %v1395 = vpack.c.b16 %v1382, %v1381
        %v1396 = vpack.c.b16 %v1384, %v1383
        %v1397 = vpack.c.b16 %v1386, %v1385
        %v1398 = vpack.c.b16 %v1388, %v1387
        %v1399 = vpack.c.b16 %v1390, %v1389
        %v1400 = vpack.c.b16 %v1392, %v1391
        %1409 = vmatpush.bf16.msra.mxu0 %v1400
        %1410 = vmatpush.bf16.msra.mxu0 %v1399
        %1411 = vmatpush.bf16.msra.mxu0 %v1398
        %1412 = vmatpush.bf16.msra.mxu0 %v1397
        %1413 = vmatpush.bf16.msra.mxu0 %v1396
        %1414 = vmatpush.bf16.msra.mxu0 %v1395
        %1415 = vmatpush.bf16.msra.mxu0 %v1394
        %1416 = vmatpush.bf16.msra.mxu0 %v1393
        %1417 = vmatmul.bf16.gmra.mxu0 %v1340
        %v1418 = vpop.f32.mrf.mxu0
        %v1419 = vadd.f32 %v1359, %v1418
        %v1420 = vpop.f32.mrf.mxu0
        %v1421 = vadd.f32 %v1359, %v1420
        %1422 = vdwg.mxu0
        %v1423 = vadd.f32 %v853, %v1419
        %v1424 = vadd.f32 %v854, %v1421
        %v1425 = vld [vmem:[%s828] sm:$0x1]
        %v1426 = vld [vmem:[%s831] sm:$0x1]
        %1427 = vadd.xlane.f32.xlu0 %v1423
        %v1428 = vpop.xlane.xlu0 %1427
        %1429 = vadd.xlane.f32.xlu0 %v1424
        %v1430 = vpop.xlane.xlu0 %1429
        %v1431 = vmul.f32 %v1428, %v867
        %v1432 = vmul.f32 %v1430, %v867
        %v1433 = vsub.f32 %v1423, %v1431
        %v1434 = vsub.f32 %v1424, %v1432
        %v1435 = vmul.f32 %v1433, %v1433
        %v1436 = vmul.f32 %v1434, %v1434
        %1437 = vadd.xlane.f32.xlu0 %v1435
        %v1438 = vpop.xlane.xlu0 %1437
        %1439 = vadd.xlane.f32.xlu0 %v1436
        %v1440 = vpop.xlane.xlu0 %1439
        %v1441 = vmul.f32 %v1438, %v867
        %v1442 = vmul.f32 %v1440, %v867
        %v1443 = vadd.f32 %v1441, 1e-05
        %v1444 = vadd.f32 %v1442, 1e-05
        %v1445 = vrsqrt.pop %v1443
        %v1446 = vmul.f32 %v1445, %v1443
        %v1447 = vmul.f32 %v1446, %v1445
        %v1448 = vmul.f32 0.5, %v1447
        %v1449 = vsub.f32 1.5, %v1448
        %v1450 = vmul.f32 %v1445, %v1449
        %vm1451 = vweird.f32 %v1443
        %vm1452 = vweird.f32 %v1445
        %vm1453 = vmor %vm1451, %vm1452
        %v1454 = vsel %vm1453, %v1445, %v1450
        %v1455 = vrsqrt.pop %v1444
        %v1456 = vmul.f32 %v1455, %v1444
        %v1457 = vmul.f32 %v1456, %v1455
        %v1458 = vmul.f32 0.5, %v1457
        %v1459 = vsub.f32 1.5, %v1458
        %v1460 = vmul.f32 %v1455, %v1459
        %vm1461 = vweird.f32 %v1444
        %vm1462 = vweird.f32 %v1455
        %vm1463 = vmor %vm1461, %vm1462
        %v1464 = vsel %vm1463, %v1455, %v1460
        %v1465 = vmul.f32 %v1433, %v1454
        %v1466 = vmul.f32 %v1434, %v1464
        %v1468 = vperm.slane %v1425, 0
        %v1470 = vmul.f32 %v1465, %v1468
        %v1471 = vmul.f32 %v1466, %v1468
        %v1473 = vperm.slane %v1426, 0
        %v1475 = vadd.f32 %v1470, %v1473
        %v1476 = vadd.f32 %v1471, %v1473
        %v1477 = vpack.c.bf16 %v1476, %v1475
        %v1478 = vld [vmem:[%s836] sm:$0xff]
        %v1479 = vld [vmem:[%s836 + $0x8] sm:$0xff]
        %v1480 = vld [vmem:[%s836 + $0x10] sm:$0xff]
        %v1481 = vld [vmem:[%s836 + $0x18] sm:$0xff]
        %v1482 = vld [vmem:[%s836 + $0x20] sm:$0xff]
        %v1483 = vld [vmem:[%s836 + $0x28] sm:$0xff]
        %v1484 = vld [vmem:[%s836 + $0x30] sm:$0xff]
        %v1485 = vld [vmem:[%s836 + $0x38] sm:$0xff]
        %v1486 = vld [vmem:[%s836 + $0x40] sm:$0xff]
        %v1487 = vld [vmem:[%s836 + $0x48] sm:$0xff]
        %v1488 = vld [vmem:[%s836 + $0x50] sm:$0xff]
        %v1489 = vld [vmem:[%s836 + $0x58] sm:$0xff]
        %v1490 = vld [vmem:[%s836 + $0x60] sm:$0xff]
        %v1491 = vld [vmem:[%s836 + $0x68] sm:$0xff]
        %v1492 = vld [vmem:[%s836 + $0x70] sm:$0xff]
        %v1493 = vld [vmem:[%s836 + $0x78] sm:$0xff]
        %v1494 = vld [vmem:[%s840] sm:$0x3]
        %v1496 = vperm.slane %v1494, 0
        %v1497 = vperm.slane %v1494, 1
        %v1516 = vunpack.c.l.b16 %v1478
        %v1517 = vunpack.c.h.b16 %v1478
        %v1518 = vunpack.c.l.b16 %v1479
        %v1519 = vunpack.c.h.b16 %v1479
        %v1520 = vunpack.c.l.b16 %v1480
        %v1521 = vunpack.c.h.b16 %v1480
        %v1522 = vunpack.c.l.b16 %v1481
        %v1523 = vunpack.c.h.b16 %v1481
        %v1524 = vunpack.c.l.b16 %v1482
        %v1525 = vunpack.c.h.b16 %v1482
        %v1526 = vunpack.c.l.b16 %v1483
        %v1527 = vunpack.c.h.b16 %v1483
        %v1528 = vunpack.c.l.b16 %v1484
        %v1529 = vunpack.c.h.b16 %v1484
        %v1530 = vunpack.c.l.b16 %v1485
        %v1531 = vunpack.c.h.b16 %v1485
        %v1532 = vunpack.c.l.b16 %v1486
        %v1533 = vunpack.c.h.b16 %v1486
        %v1534 = vunpack.c.l.b16 %v1487
        %v1535 = vunpack.c.h.b16 %v1487
        %v1536 = vunpack.c.l.b16 %v1488
        %v1537 = vunpack.c.h.b16 %v1488
        %v1538 = vunpack.c.l.b16 %v1489
        %v1539 = vunpack.c.h.b16 %v1489
        %v1540 = vunpack.c.l.b16 %v1490
        %v1541 = vunpack.c.h.b16 %v1490
        %v1542 = vunpack.c.l.b16 %v1491
        %v1543 = vunpack.c.h.b16 %v1491
        %v1544 = vunpack.c.l.b16 %v1492
        %v1545 = vunpack.c.h.b16 %v1492
        %v1546 = vunpack.c.l.b16 %v1493
        %v1547 = vunpack.c.h.b16 %v1493
        %v1548 = vpack.c.b16 %v1518, %v1516
        %v1549 = vpack.c.b16 %v1519, %v1517
        %v1550 = vpack.c.b16 %v1522, %v1520
        %v1551 = vpack.c.b16 %v1523, %v1521
        %v1552 = vpack.c.b16 %v1526, %v1524
        %v1553 = vpack.c.b16 %v1527, %v1525
        %v1554 = vpack.c.b16 %v1530, %v1528
        %v1555 = vpack.c.b16 %v1531, %v1529
        %v1556 = vpack.c.b16 %v1534, %v1532
        %v1557 = vpack.c.b16 %v1535, %v1533
        %v1558 = vpack.c.b16 %v1538, %v1536
        %v1559 = vpack.c.b16 %v1539, %v1537
        %v1560 = vpack.c.b16 %v1542, %v1540
        %v1561 = vpack.c.b16 %v1543, %v1541
        %v1562 = vpack.c.b16 %v1546, %v1544
        %v1563 = vpack.c.b16 %v1547, %v1545
        %1580 = vmatpush.bf16.msra.mxu0 %v1562
        %1581 = vmatpush.bf16.msra.mxu0 %v1560
        %1582 = vmatpush.bf16.msra.mxu0 %v1558
        %1583 = vmatpush.bf16.msra.mxu0 %v1556
        %1584 = vmatpush.bf16.msra.mxu0 %v1554
        %1585 = vmatpush.bf16.msra.mxu0 %v1552
        %1586 = vmatpush.bf16.msra.mxu0 %v1550
        %1587 = vmatpush.bf16.msra.mxu0 %v1548
        %1588 = vmatmul.bf16.gmra.mxu0 %v1477
        %v1589 = vpop.f32.mrf.mxu0
        %v1590 = vadd.f32 %v1496, %v1589
        %v1591 = vpop.f32.mrf.mxu0
        %v1592 = vadd.f32 %v1496, %v1591
        %1593 = vdwg.mxu0
        %1594 = vmatpush.bf16.msra.mxu0 %v1563
        %1595 = vmatpush.bf16.msra.mxu0 %v1561
        %1596 = vmatpush.bf16.msra.mxu0 %v1559
        %1597 = vmatpush.bf16.msra.mxu0 %v1557
        %1598 = vmatpush.bf16.msra.mxu0 %v1555
        %1599 = vmatpush.bf16.msra.mxu0 %v1553
        %1600 = vmatpush.bf16.msra.mxu0 %v1551
        %1601 = vmatpush.bf16.msra.mxu0 %v1549
        %1602 = vmatmul.bf16.gmra.mxu0 %v1477
        %v1603 = vpop.f32.mrf.mxu0
        %v1604 = vadd.f32 %v1497, %v1603
        %v1605 = vpop.f32.mrf.mxu0
        %v1606 = vadd.f32 %v1497, %v1605
        %1607 = vdwg.mxu0
        %v1608 = vmax.f32 %v1590, 0.0
        %v1609 = vmax.f32 %v1604, 0.0
        %v1610 = vmax.f32 %v1592, 0.0
        %v1611 = vmax.f32 %v1606, 0.0
        %v1612 = vpack.c.bf16 %v1610, %v1608
        %v1613 = vpack.c.bf16 %v1611, %v1609
        %v1614 = vld [vmem:[%s698] sm:$0xf]
        %v1615 = vld [vmem:[%s698 + $0x4] sm:$0xf]
        %v1616 = vld [vmem:[%s698 + $0x8] sm:$0xf]
        %v1617 = vld [vmem:[%s698 + $0xc] sm:$0xf]
        %v1618 = vld [vmem:[%s698 + $0x10] sm:$0xf]
        %v1619 = vld [vmem:[%s698 + $0x14] sm:$0xf]
        %v1620 = vld [vmem:[%s698 + $0x18] sm:$0xf]
        %v1621 = vld [vmem:[%s698 + $0x1c] sm:$0xf]
        %v1622 = vld [vmem:[%s698 + $0x20] sm:$0xf]
        %v1623 = vld [vmem:[%s698 + $0x24] sm:$0xf]
        %v1624 = vld [vmem:[%s698 + $0x28] sm:$0xf]
        %v1625 = vld [vmem:[%s698 + $0x2c] sm:$0xf]
        %v1626 = vld [vmem:[%s698 + $0x30] sm:$0xf]
        %v1627 = vld [vmem:[%s698 + $0x34] sm:$0xf]
        %v1628 = vld [vmem:[%s698 + $0x38] sm:$0xf]
        %v1629 = vld [vmem:[%s698 + $0x3c] sm:$0xf]
        %v1630 = vld [vmem:[%s698 + $0x40] sm:$0xf]
        %v1631 = vld [vmem:[%s698 + $0x44] sm:$0xf]
        %v1632 = vld [vmem:[%s698 + $0x48] sm:$0xf]
        %v1633 = vld [vmem:[%s698 + $0x4c] sm:$0xf]
        %v1634 = vld [vmem:[%s698 + $0x50] sm:$0xf]
        %v1635 = vld [vmem:[%s698 + $0x54] sm:$0xf]
        %v1636 = vld [vmem:[%s698 + $0x58] sm:$0xf]
        %v1637 = vld [vmem:[%s698 + $0x5c] sm:$0xf]
        %v1638 = vld [vmem:[%s698 + $0x60] sm:$0xf]
        %v1639 = vld [vmem:[%s698 + $0x64] sm:$0xf]
        %v1640 = vld [vmem:[%s698 + $0x68] sm:$0xf]
        %v1641 = vld [vmem:[%s698 + $0x6c] sm:$0xf]
        %v1642 = vld [vmem:[%s698 + $0x70] sm:$0xf]
        %v1643 = vld [vmem:[%s698 + $0x74] sm:$0xf]
        %v1644 = vld [vmem:[%s698 + $0x78] sm:$0xf]
        %v1645 = vld [vmem:[%s698 + $0x7c] sm:$0xf]
        %v1646 = vld [vmem:[%s843] sm:$0x1]
        %v1648 = vperm.slane %v1646, 0
        %v1682 = vunpack.c.l.b16 %v1614
        %v1683 = vunpack.c.l.b16 %v1615
        %v1684 = vunpack.c.l.b16 %v1616
        %v1685 = vunpack.c.l.b16 %v1617
        %v1686 = vunpack.c.l.b16 %v1618
        %v1687 = vunpack.c.l.b16 %v1619
        %v1688 = vunpack.c.l.b16 %v1620
        %v1689 = vunpack.c.l.b16 %v1621
        %v1690 = vunpack.c.l.b16 %v1622
        %v1691 = vunpack.c.l.b16 %v1623
        %v1692 = vunpack.c.l.b16 %v1624
        %v1693 = vunpack.c.l.b16 %v1625
        %v1694 = vunpack.c.l.b16 %v1626
        %v1695 = vunpack.c.l.b16 %v1627
        %v1696 = vunpack.c.l.b16 %v1628
        %v1697 = vunpack.c.l.b16 %v1629
        %v1698 = vunpack.c.l.b16 %v1630
        %v1699 = vunpack.c.l.b16 %v1631
        %v1700 = vunpack.c.l.b16 %v1632
        %v1701 = vunpack.c.l.b16 %v1633
        %v1702 = vunpack.c.l.b16 %v1634
        %v1703 = vunpack.c.l.b16 %v1635
        %v1704 = vunpack.c.l.b16 %v1636
        %v1705 = vunpack.c.l.b16 %v1637
        %v1706 = vunpack.c.l.b16 %v1638
        %v1707 = vunpack.c.l.b16 %v1639
        %v1708 = vunpack.c.l.b16 %v1640
        %v1709 = vunpack.c.l.b16 %v1641
        %v1710 = vunpack.c.l.b16 %v1642
        %v1711 = vunpack.c.l.b16 %v1643
        %v1712 = vunpack.c.l.b16 %v1644
        %v1713 = vunpack.c.l.b16 %v1645
        %v1714 = vpack.c.b16 %v1683, %v1682
        %v1715 = vpack.c.b16 %v1685, %v1684
        %v1716 = vpack.c.b16 %v1687, %v1686
        %v1717 = vpack.c.b16 %v1689, %v1688
        %v1718 = vpack.c.b16 %v1691, %v1690
        %v1719 = vpack.c.b16 %v1693, %v1692
        %v1720 = vpack.c.b16 %v1695, %v1694
        %v1721 = vpack.c.b16 %v1697, %v1696
        %v1722 = vpack.c.b16 %v1699, %v1698
        %v1723 = vpack.c.b16 %v1701, %v1700
        %v1724 = vpack.c.b16 %v1703, %v1702
        %v1725 = vpack.c.b16 %v1705, %v1704
        %v1726 = vpack.c.b16 %v1707, %v1706
        %v1727 = vpack.c.b16 %v1709, %v1708
        %v1728 = vpack.c.b16 %v1711, %v1710
        %v1729 = vpack.c.b16 %v1713, %v1712
        %1746 = vmatpush.bf16.msra.mxu0 %v1721
        %1747 = vmatpush.bf16.msra.mxu0 %v1720
        %1748 = vmatpush.bf16.msra.mxu0 %v1719
        %1749 = vmatpush.bf16.msra.mxu0 %v1718
        %1750 = vmatpush.bf16.msra.mxu0 %v1717
        %1751 = vmatpush.bf16.msra.mxu0 %v1716
        %1752 = vmatpush.bf16.msra.mxu0 %v1715
        %1753 = vmatpush.bf16.msra.mxu0 %v1714
        %1754 = vmatmul.bf16.gmra.mxu0 %v1612
        %v1755 = vpop.f32.mrf.mxu0
        %v1756 = vadd.f32 %v1648, %v1755
        %v1757 = vpop.f32.mrf.mxu0
        %v1758 = vadd.f32 %v1648, %v1757
        %1759 = vdwg.mxu0
        %1760 = vmatpush.bf16.msra.mxu0 %v1729
        %1761 = vmatpush.bf16.msra.mxu0 %v1728
        %1762 = vmatpush.bf16.msra.mxu0 %v1727
        %1763 = vmatpush.bf16.msra.mxu0 %v1726
        %1764 = vmatpush.bf16.msra.mxu0 %v1725
        %1765 = vmatpush.bf16.msra.mxu0 %v1724
        %1766 = vmatpush.bf16.msra.mxu0 %v1723
        %1767 = vmatpush.bf16.msra.mxu0 %v1722
        %1768 = vmatmul.bf16.gmra.mxu0 %v1613
        %v1769 = vpop.f32.mrf.mxu0
        %v1770 = vadd.f32 %v1756, %v1769
        %v1771 = vpop.f32.mrf.mxu0
        %v1772 = vadd.f32 %v1758, %v1771
        %1773 = vdwg.mxu0
        %v1774 = vadd.f32 %v1423, %v1770
        %v1775 = vadd.f32 %v1424, %v1772
        %1776 = vst [vmem:[#allocation2] sm:$0xff] %v1774
        %1777 = vst [vmem:[#allocation2 + $0x8] sm:$0xff] %v1775
        %p1778 = scmp.eq.s32.totalorder %s43, 1
        // Predicated region
        $region109: #{opt_forward.1} parent=91 // pred_check
          %p1779 = pneg %p1778
        $region110: #{opt_forward.1} parent=91 // pred_check_branch
          %1781 = sbr.rel (%p1779) target = $region112
        $region111: #{opt_forward.1} parent=91 // pred_region
          %v1782 = vld [vmem:[%s15] sm:$0x1]
          %v1783 = vld [vmem:[%s16] sm:$0x1]
          %1784 = vadd.xlane.f32.xlu0 %v1774
          %v1785 = vpop.xlane.xlu0 %1784
          %1786 = vadd.xlane.f32.xlu0 %v1775
          %v1787 = vpop.xlane.xlu0 %1786
          %v1788 = vmul.f32 %v1785, %v867
          %v1789 = vmul.f32 %v1787, %v867
          %v1790 = vsub.f32 %v1774, %v1788
          %v1791 = vsub.f32 %v1775, %v1789
          %v1792 = vmul.f32 %v1790, %v1790
          %v1793 = vmul.f32 %v1791, %v1791
          %1794 = vadd.xlane.f32.xlu0 %v1792
          %v1795 = vpop.xlane.xlu0 %1794
          %1796 = vadd.xlane.f32.xlu0 %v1793
          %v1797 = vpop.xlane.xlu0 %1796
          %v1798 = vmul.f32 %v1795, %v867
          %v1799 = vmul.f32 %v1797, %v867
          %v1800 = vadd.f32 %v1798, 1e-05
          %v1801 = vadd.f32 %v1799, 1e-05
          %v1802 = vrsqrt.pop %v1800
          %v1803 = vmul.f32 %v1802, %v1800
          %v1804 = vmul.f32 %v1803, %v1802
          %v1805 = vmul.f32 0.5, %v1804
          %v1806 = vsub.f32 1.5, %v1805
          %v1807 = vmul.f32 %v1802, %v1806
          %vm1808 = vweird.f32 %v1800
          %vm1809 = vweird.f32 %v1802
          %vm1810 = vmor %vm1808, %vm1809
          %v1811 = vsel %vm1810, %v1802, %v1807
          %v1812 = vrsqrt.pop %v1801
          %v1813 = vmul.f32 %v1812, %v1801
          %v1814 = vmul.f32 %v1813, %v1812
          %v1815 = vmul.f32 0.5, %v1814
          %v1816 = vsub.f32 1.5, %v1815
          %v1817 = vmul.f32 %v1812, %v1816
          %vm1818 = vweird.f32 %v1801
          %vm1819 = vweird.f32 %v1812
          %vm1820 = vmor %vm1818, %vm1819
          %v1821 = vsel %vm1820, %v1812, %v1817
          %v1822 = vmul.f32 %v1790, %v1811
          %v1823 = vmul.f32 %v1791, %v1821
          %v1825 = vperm.slane %v1782, 0
          %v1827 = vmul.f32 %v1822, %v1825
          %v1828 = vmul.f32 %v1823, %v1825
          %v1830 = vperm.slane %v1783, 0
          %v1832 = vadd.f32 %v1827, %v1830
          %v1833 = vadd.f32 %v1828, %v1830
          %v1834 = vpack.c.bf16 %v1833, %v1832
          %v1835 = vld [vmem:[#allocation8] sm:$0xff]
          %v1836 = vld [vmem:[#allocation8 + $0x8] sm:$0xff]
          %v1837 = vld [vmem:[#allocation8 + $0x10] sm:$0xff]
          %v1838 = vld [vmem:[#allocation8 + $0x18] sm:$0xff]
          %v1839 = vld [vmem:[#allocation8 + $0x20] sm:$0xff]
          %v1840 = vld [vmem:[#allocation8 + $0x28] sm:$0xff]
          %v1841 = vld [vmem:[#allocation8 + $0x30] sm:$0xff]
          %v1842 = vld [vmem:[#allocation8 + $0x38] sm:$0xff]
          %v1843 = vld [vmem:[#allocation8 + $0x40] sm:$0xff]
          %v1844 = vld [vmem:[#allocation8 + $0x48] sm:$0xff]
          %v1845 = vld [vmem:[#allocation8 + $0x50] sm:$0xff]
          %v1846 = vld [vmem:[#allocation8 + $0x58] sm:$0xff]
          %v1847 = vld [vmem:[#allocation8 + $0x60] sm:$0xff]
          %v1848 = vld [vmem:[#allocation8 + $0x68] sm:$0xff]
          %v1849 = vld [vmem:[#allocation8 + $0x70] sm:$0xff]
          %v1850 = vld [vmem:[#allocation8 + $0x78] sm:$0xff]
          %v1851 = vld [vmem:[#allocation8 + $0x80] sm:$0xff]
          %v1852 = vld [vmem:[#allocation8 + $0x88] sm:$0xff]
          %v1853 = vld [vmem:[#allocation8 + $0x90] sm:$0xff]
          %v1854 = vld [vmem:[#allocation8 + $0x98] sm:$0xff]
          %v1855 = vld [vmem:[#allocation8 + $0xa0] sm:$0xff]
          %v1856 = vld [vmem:[#allocation8 + $0xa8] sm:$0xff]
          %v1857 = vld [vmem:[#allocation8 + $0xb0] sm:$0xff]
          %v1858 = vld [vmem:[#allocation8 + $0xb8] sm:$0xff]
          %v1859 = vld [vmem:[#allocation8 + $0xc0] sm:$0xff]
          %v1860 = vld [vmem:[#allocation8 + $0xc8] sm:$0xff]
          %v1861 = vld [vmem:[#allocation8 + $0xd0] sm:$0xff]
          %v1862 = vld [vmem:[#allocation8 + $0xd8] sm:$0xff]
          %v1863 = vld [vmem:[#allocation8 + $0xe0] sm:$0xff]
          %v1864 = vld [vmem:[#allocation8 + $0xe8] sm:$0xff]
          %v1865 = vld [vmem:[#allocation8 + $0xf0] sm:$0xff]
          %v1866 = vld [vmem:[#allocation8 + $0xf8] sm:$0xff]
          %v1899 = vunpack.c.l.b16 %v1835
          %v1900 = vunpack.c.h.b16 %v1835
          %v1901 = vunpack.c.l.b16 %v1836
          %v1902 = vunpack.c.h.b16 %v1836
          %v1903 = vunpack.c.l.b16 %v1837
          %v1904 = vunpack.c.h.b16 %v1837
          %v1905 = vunpack.c.l.b16 %v1838
          %v1906 = vunpack.c.h.b16 %v1838
          %v1907 = vunpack.c.l.b16 %v1839
          %v1908 = vunpack.c.h.b16 %v1839
          %v1909 = vunpack.c.l.b16 %v1840
          %v1910 = vunpack.c.h.b16 %v1840
          %v1911 = vunpack.c.l.b16 %v1841
          %v1912 = vunpack.c.h.b16 %v1841
          %v1913 = vunpack.c.l.b16 %v1842
          %v1914 = vunpack.c.h.b16 %v1842
          %v1915 = vunpack.c.l.b16 %v1843
          %v1916 = vunpack.c.h.b16 %v1843
          %v1917 = vunpack.c.l.b16 %v1844
          %v1918 = vunpack.c.h.b16 %v1844
          %v1919 = vunpack.c.l.b16 %v1845
          %v1920 = vunpack.c.h.b16 %v1845
          %v1921 = vunpack.c.l.b16 %v1846
          %v1922 = vunpack.c.h.b16 %v1846
          %v1923 = vunpack.c.l.b16 %v1847
          %v1924 = vunpack.c.h.b16 %v1847
          %v1925 = vunpack.c.l.b16 %v1848
          %v1926 = vunpack.c.h.b16 %v1848
          %v1927 = vunpack.c.l.b16 %v1849
          %v1928 = vunpack.c.h.b16 %v1849
          %v1929 = vunpack.c.l.b16 %v1850
          %v1930 = vunpack.c.h.b16 %v1850
          %v1931 = vunpack.c.l.b16 %v1851
          %v1932 = vunpack.c.h.b16 %v1851
          %v1933 = vunpack.c.l.b16 %v1852
          %v1934 = vunpack.c.h.b16 %v1852
          %v1935 = vunpack.c.l.b16 %v1853
          %v1936 = vunpack.c.h.b16 %v1853
          %v1937 = vunpack.c.l.b16 %v1854
          %v1938 = vunpack.c.h.b16 %v1854
          %v1939 = vunpack.c.l.b16 %v1855
          %v1940 = vunpack.c.h.b16 %v1855
          %v1941 = vunpack.c.l.b16 %v1856
          %v1942 = vunpack.c.h.b16 %v1856
          %v1943 = vunpack.c.l.b16 %v1857
          %v1944 = vunpack.c.h.b16 %v1857
          %v1945 = vunpack.c.l.b16 %v1858
          %v1946 = vunpack.c.h.b16 %v1858
          %v1947 = vunpack.c.l.b16 %v1859
          %v1948 = vunpack.c.h.b16 %v1859
          %v1949 = vunpack.c.l.b16 %v1860
          %v1950 = vunpack.c.h.b16 %v1860
          %v1951 = vunpack.c.l.b16 %v1861
          %v1952 = vunpack.c.h.b16 %v1861
          %v1953 = vunpack.c.l.b16 %v1862
          %v1954 = vunpack.c.h.b16 %v1862
          %v1955 = vunpack.c.l.b16 %v1863
          %v1956 = vunpack.c.h.b16 %v1863
          %v1957 = vunpack.c.l.b16 %v1864
          %v1958 = vunpack.c.h.b16 %v1864
          %v1959 = vunpack.c.l.b16 %v1865
          %v1960 = vunpack.c.h.b16 %v1865
          %v1961 = vunpack.c.l.b16 %v1866
          %v1962 = vunpack.c.h.b16 %v1866
          %v1963 = vpack.c.b16 %v1903, %v1899
          %v1964 = vpack.c.b16 %v1904, %v1900
          %v1965 = vpack.c.b16 %v1905, %v1901
          %v1966 = vpack.c.b16 %v1906, %v1902
          %v1967 = vpack.c.b16 %v1911, %v1907
          %v1968 = vpack.c.b16 %v1912, %v1908
          %v1969 = vpack.c.b16 %v1913, %v1909
          %v1970 = vpack.c.b16 %v1914, %v1910
          %v1971 = vpack.c.b16 %v1919, %v1915
          %v1972 = vpack.c.b16 %v1920, %v1916
          %v1973 = vpack.c.b16 %v1921, %v1917
          %v1974 = vpack.c.b16 %v1922, %v1918
          %v1975 = vpack.c.b16 %v1927, %v1923
          %v1976 = vpack.c.b16 %v1928, %v1924
          %v1977 = vpack.c.b16 %v1929, %v1925
          %v1978 = vpack.c.b16 %v1930, %v1926
          %v1979 = vpack.c.b16 %v1935, %v1931
          %v1980 = vpack.c.b16 %v1936, %v1932
          %v1981 = vpack.c.b16 %v1937, %v1933
          %v1982 = vpack.c.b16 %v1938, %v1934
          %v1983 = vpack.c.b16 %v1943, %v1939
          %v1984 = vpack.c.b16 %v1944, %v1940
          %v1985 = vpack.c.b16 %v1945, %v1941
          %v1986 = vpack.c.b16 %v1946, %v1942
          %v1987 = vpack.c.b16 %v1951, %v1947
          %v1988 = vpack.c.b16 %v1952, %v1948
          %v1989 = vpack.c.b16 %v1953, %v1949
          %v1990 = vpack.c.b16 %v1954, %v1950
          %v1991 = vpack.c.b16 %v1959, %v1955
          %v1992 = vpack.c.b16 %v1960, %v1956
          %v1993 = vpack.c.b16 %v1961, %v1957
          %v1994 = vpack.c.b16 %v1962, %v1958
          %2027 = vmatpush.bf16.msra.mxu0 %v1991
          %2028 = vmatpush.bf16.msra.mxu0 %v1987
          %2029 = vmatpush.bf16.msra.mxu0 %v1983
          %2030 = vmatpush.bf16.msra.mxu0 %v1979
          %2031 = vmatpush.bf16.msra.mxu0 %v1975
          %2032 = vmatpush.bf16.msra.mxu0 %v1971
          %2033 = vmatpush.bf16.msra.mxu0 %v1967
          %2034 = vmatpush.bf16.msra.mxu0 %v1963
          %2035 = vmatmul.bf16.gmra.mxu0 %v1834
          %v2036 = vpop.f32.mrf.mxu0
          %v2037 = vadd.f32 0.0, %v2036
          %v2038 = vpop.f32.mrf.mxu0
          %v2039 = vadd.f32 0.0, %v2038
          %2040 = vdwg.mxu0
          %2041 = vmatpush.bf16.msra.mxu0 %v1992
          %2042 = vmatpush.bf16.msra.mxu0 %v1988
          %2043 = vmatpush.bf16.msra.mxu0 %v1984
          %2044 = vmatpush.bf16.msra.mxu0 %v1980
          %2045 = vmatpush.bf16.msra.mxu0 %v1976
          %2046 = vmatpush.bf16.msra.mxu0 %v1972
          %2047 = vmatpush.bf16.msra.mxu0 %v1968
          %2048 = vmatpush.bf16.msra.mxu0 %v1964
          %2049 = vmatmul.bf16.gmra.mxu0 %v1834
          %v2050 = vpop.f32.mrf.mxu0
          %v2051 = vadd.f32 0.0, %v2050
          %v2052 = vpop.f32.mrf.mxu0
          %v2053 = vadd.f32 0.0, %v2052
          %2054 = vdwg.mxu0
          %2055 = vmatpush.bf16.msra.mxu0 %v1993
          %2056 = vmatpush.bf16.msra.mxu0 %v1989
          %2057 = vmatpush.bf16.msra.mxu0 %v1985
          %2058 = vmatpush.bf16.msra.mxu0 %v1981
          %2059 = vmatpush.bf16.msra.mxu0 %v1977
          %2060 = vmatpush.bf16.msra.mxu0 %v1973
          %2061 = vmatpush.bf16.msra.mxu0 %v1969
          %2062 = vmatpush.bf16.msra.mxu0 %v1965
          %2063 = vmatmul.bf16.gmra.mxu0 %v1834
          %v2064 = vpop.f32.mrf.mxu0
          %v2065 = vadd.f32 0.0, %v2064
          %v2066 = vpop.f32.mrf.mxu0
          %v2067 = vadd.f32 0.0, %v2066
          %2068 = vdwg.mxu0
          %2069 = vmatpush.bf16.msra.mxu0 %v1994
          %2070 = vmatpush.bf16.msra.mxu0 %v1990
          %2071 = vmatpush.bf16.msra.mxu0 %v1986
          %2072 = vmatpush.bf16.msra.mxu0 %v1982
          %2073 = vmatpush.bf16.msra.mxu0 %v1978
          %2074 = vmatpush.bf16.msra.mxu0 %v1974
          %2075 = vmatpush.bf16.msra.mxu0 %v1970
          %2076 = vmatpush.bf16.msra.mxu0 %v1966
          %2077 = vmatmul.bf16.gmra.mxu0 %v1834
          %v2078 = vpop.f32.mrf.mxu0
          %v2079 = vadd.f32 0.0, %v2078
          %v2080 = vpop.f32.mrf.mxu0
          %v2081 = vadd.f32 0.0, %v2080
          %2082 = vdwg.mxu0
          %2083 = vst [vmem:[%s802] sm:$0xff] %v2037
          %2084 = vst [vmem:[%s802 + $0x8] sm:$0xff] %v2051
          %2085 = vst [vmem:[%s802 + $0x10] sm:$0xff] %v2065
          %2086 = vst [vmem:[%s802 + $0x18] sm:$0xff] %v2079
          %2087 = vst [vmem:[%s802 + $0x20] sm:$0xff] %v2039
          %2088 = vst [vmem:[%s802 + $0x28] sm:$0xff] %v2053
          %2089 = vst [vmem:[%s802 + $0x30] sm:$0xff] %v2067
          %2090 = vst [vmem:[%s802 + $0x38] sm:$0xff] %v2081
        $region112: #{opt_forward.1} parent=91 // pred_fallthru
          _
        %s2091 = sand.u32 %s501, 1
        %s2092 = scalar_lea.sflag [#allocation5], %s2091
        %s2093 = sand.u32 %s501, 1
        %s2094 = smul.addr %s2093, 64
        %s2095 = scalar_lea.vmem [#allocation9], %s2094
        // Predicated region
        $region113: #{opt_forward.1} parent=91 // pred_check
          %p2096 = pneg %p511
        $region114: #{opt_forward.1} parent=91 // pred_check_branch
          %2098 = sbr.rel (%p2096) target = $region116
        $region115: #{opt_forward.1} parent=91 // pred_region
          %2100 = vsyncadd %s2092, 0
          %s2101 = smul.addr %s42, 8
          %s2102 = smul.addr %s2101, 8
          %s2103 = scalar_lea.hbm %s18, %s2102
          %s2104 = sshll.u32 %s2095, 4
          %s2105 = int_to_ptr.vmem [resolvable:$true] %s2104
          %s2106 = sshll.u32 %s2103, 4
          %s2107 = int_to_ptr.hbm [resolvable:$true] %s2106
          %2112 = dma.vmem_to_hbm [thread:$0]  %s2105, 1024, %s2107, %s2092, 512, 512, 32
        $region116: #{opt_forward.1} parent=91 // pred_fallthru
          _
      $region92: #{opt_forward.1} parent=5 // pred_fallthru
        _
      %p2113 = scmp.le.s32.totalorder 2, %s33
      // Predicated region
      $region117: #{opt_forward.1} parent=5 // pred_check
        %p2114 = pneg %p2113
      $region118: #{opt_forward.1} parent=5 // pred_check_branch
        %2116 = sbr.rel (%p2114) target = $region120
      $region119: #{opt_forward.1} parent=5 // pred_region
        %s2117 = ssub.s32 %s33, 2
        // Predicated region
        $region121: #{opt_forward.1} parent=119 // pred_check
          %p2118 = pneg %p517
        $region122: #{opt_forward.1} parent=119 // pred_check_branch
          %2120 = sbr.rel (%p2118) target = $region124
        $region123: #{opt_forward.1} parent=119 // pred_region
          %s2121 = sand.u32 %s502, 1
          %s2122 = scalar_lea.sflag [#allocation5], %s2121
          %s2123 = sand.u32 %s502, 1
          %s2124 = smul.addr %s2123, 64
          %s2125 = scalar_lea.vmem [#allocation9], %s2124
          %2127 = dma.done %s2122, 1024
        $region124: #{opt_forward.1} parent=119 // pred_fallthru
          _
      $region120: #{opt_forward.1} parent=5 // pred_fallthru
        _
    $region6: #{opt_forward.1} parent=1 // loop_footer
      %s37 = sadd.s32 1, %s33
    $region7: #{opt_forward.1} parent=1 // loop_footer_branch
      %32 = sbr.rel target = $region3
    $region8: #{opt_forward.1} parent=1 // loop_exit
      _
    %2128 = vsyncpa [#allocation4], 1
    %s2129 = scalar_lea.sflag [#allocation4], 1
    %2130 = vsyncpa %s2129, 1
    %2131 = vsyncpa [#allocation7], 1
    %s2132 = scalar_lea.sflag [#allocation7], 1
    %2133 = vsyncpa %s2132, 1
    %2134 = vsyncpa [#allocation5], 1
    %s2135 = scalar_lea.sflag [#allocation5], 1
    %2136 = vsyncpa %s2135, 1

</llo_original>
